<compile_context>
chip_gen: v5e
topology: v5e:2x2
jax: 0.10.0
libtpu: 0.0.40
codegen_flags: <defaults>
</compile_context>

<pallas_src>
import functools

import jax
import jax.numpy as jnp
from jax.experimental import pallas as pl
from jax.experimental.pallas import tpu as pltpu

FILTER_SIZES = (3, 4, 5)
LANE = 128


def _round_up(x, m):
    return ((x + m - 1) // m) * m


# ----------------------------- Pallas kernel ------------------------------ #
def textcnn_kernel(emb_ref, wall_ref, aux_ref, out_ref, *,
                   b_tile, seq_len, f_pad, louts):
    # One fused MXU matmul for every filter width and every tap:
    # (B_TILE*L, E) bf16 @ (E, sum(k)*F_pad) bf16 -> (B_TILE*L, C) f32.
    y = jnp.dot(emb_ref[...], wall_ref[...],
                preferred_element_type=jnp.float32)
    # Row-split reshape; seq_len % 8 == 0 (wrapper pads), so it is
    # sublane-tile aligned and does not materialize a VMEM copy.
    y = y.reshape(b_tile, seq_len, y.shape[-1])            # (Bt, L, C)

    logit = None
    off = 0
    for idx, k in enumerate(FILTER_SIZES):                 # static Python loop
        lout = louts[idx]
        # acc[b, l, f] = sum_j y[b, l + j, tap_j block].  Every tap block is a
        # 128-lane-aligned slab, so these are full-width VPU adds.
        # TODO(synk): the j=1..k-1 sublane shifts could use pltpu.roll on the
        # flat row axis + an -inf row mask to keep adds on 8-aligned tiles.
        acc = y[:, 0:lout, off:off + f_pad]                # tap-0 init, no zeros
        for j in range(1, k):
            acc = acc + y[:, j:j + lout, off + j * f_pad:off + (j + 1) * f_pad]
        off += k * f_pad

        # relu(max_l(acc) + b) == max_l(relu(acc + b)):  bias/ReLU after the
        # pool run on (Bt, F_pad) instead of (Bt, Lout, F_pad).  Padded lanes
        # (zero weights/bias/fc-row) stay exactly zero and never contribute.
        pooled = jnp.maximum(jnp.max(acc, axis=1) + aux_ref[idx:idx + 1, :],
                             0.0)                          # (Bt, F_pad)

        # FC contribution emitted lane-dense over batch:
        # (1, F_pad) . (Bt, F_pad)^T -> (1, Bt) on the (idle) MXU, so the final
        # store needs no sublane->lane relayout and no masked partial vst.
        contrib = jax.lax.dot_general(
            aux_ref[3 + idx:4 + idx, :], pooled,
            dimension_numbers=(((1,), (1,)), ((), ())),
            preferred_element_type=jnp.float32)            # (1, Bt)
        logit = contrib if logit is None else logit + contrib

    logit = logit + aux_ref[6:7, 0:1]                      # fc bias (broadcast)
    # Dropout is identity in eval mode.
    # TODO(synk): training-mode inverted dropout via pltpu.prng_seed /
    # pltpu.prng_random_bits if a training forward is ever needed.
    out_ref[0] = jax.nn.sigmoid(logit)                     # (1, Bt) lane-dense


# ------------------------------- wrapper ---------------------------------- #
def _pick_b_tile(batch, seq, requested=None):
    """Batch tile: M = b_tile*seq >= 256 where possible, but keep >= 2 grid
    steps (both v7x TensorCores busy) and divide the batch exactly."""
    if requested is None:
        bt = max(8, -(-256 // seq))            # aim for MXU-M >= 256
    else:
        bt = requested
    bt = min(bt, batch)
    if batch >= 2:
        bt = min(bt, batch // 2)               # nb >= 2 -> both TCs get work
    bt = max(bt, 1)
    while batch % bt:                          # largest divisor of batch <= bt
        bt -= 1
    return bt


def textcnn_forward(token_emb, kparams, *, b_tile=None):
    """token_emb: (B, L, E) embeddings (ideally already bf16 -- gather from the
    bf16 table in kparams so no f32 round-trip); kparams: kernel layout."""
    B, L, E = token_emb.shape
    f_pad = kparams['f_pad']
    w_all = kparams['w_all']
    C = w_all.shape[-1]
    assert w_all.shape[0] == E
    assert L >= max(FILTER_SIZES), "sequence shorter than largest filter width"
    louts = tuple(L - k + 1 for k in FILTER_SIZES)         # from ORIGINAL L

    # Single bf16 read of the emb stream (cast only if the caller didn't).
    if token_emb.dtype != jnp.bfloat16:
        token_emb = token_emb.astype(jnp.bfloat16)
    # Pad L to a multiple of 8 so the in-kernel reshape is tile-aligned.
    # Padded rows are never read by a valid conv window (louts use original L).
    L_pad = _round_up(L, 8)
    if L_pad != L:
        token_emb = jnp.pad(token_emb, ((0, 0), (0, L_pad - L), (0, 0)))
    emb2d = token_emb.reshape(B * L_pad, E)

    bt = _pick_b_tile(B, L_pad, b_tile)
    assert B % bt == 0
    nb = B // bt

    # Per-step VMEM budget (double-buffered where pipelined).  Sized to fit
    # v7x's 64 MiB physical / 32 MiB scoped VMEM; v5e/v6e have more headroom.
    est = (2 * bt * L_pad * E * 2          # emb tile (bf16, double-buffered)
           + 2 * E * C * 2                 # resident W_all (bf16)
           + 2 * 8 * f_pad * 4             # resident aux (f32)
           + bt * L_pad * C * 4            # f32 Y slab
           + 2 * bt * L_pad * f_pad * 4    # live acc + slice temp
           + 2 * bt * 4)                   # output row
    try:
        phys_vmem = int(pltpu.get_tpu_info().vmem_capacity_bytes)
    except Exception:                      # conservative: v7x per-TC VMEM
        phys_vmem = 64 << 20
    vmem_limit = int(min(max(32 << 20, 2 * est), (phys_vmem * 3) // 4))
    assert 2 * est <= vmem_limit, (
        "batch tile too large for VMEM; reduce b_tile", est, vmem_limit)

    kernel = functools.partial(textcnn_kernel, b_tile=bt, seq_len=L_pad,
                               f_pad=f_pad, louts=louts)

    grid_spec = pltpu.PrefetchScalarGridSpec(
        num_scalar_prefetch=0,
        grid=(nb,),
        in_specs=[
            # Streamed emb tile (double-buffered HBM->VMEM).
            # TODO(synk): sweep pipeline_mode=pl.Buffered(3) if DMA is exposed
            # at production tile sizes (costs VMEM, scarce on v7x).
            pl.BlockSpec((bt * L_pad, E), lambda b: (b, 0)),
            # Fused conv weights + merged bias/FC aux: VMEM-resident.
            pl.BlockSpec((E, C), lambda b: (0, 0)),
            pl.BlockSpec((8, f_pad), lambda b: (0, 0)),
        ],
        out_specs=pl.BlockSpec((1, 1, bt), lambda b: (b, 0, 0)),  # lane-dense
    )
    cost = pl.CostEstimate(
        flops=2 * B * L_pad * E * C,
        transcendentals=B,                                  # sigmoid
        bytes_accessed=B * L_pad * E * 2 + E * C * 2 + 8 * f_pad * 4 + B * 4)

    out = pl.pallas_call(
        kernel,
        out_shape=jax.ShapeDtypeStruct((nb, 1, bt), jnp.float32),
        grid_spec=grid_spec,
        compiler_params=pltpu.CompilerParams(
            dimension_semantics=("parallel",),              # batch tiles -> TCs
            vmem_limit_bytes=vmem_limit),
        cost_estimate=cost,
    )(emb2d, w_all, kparams['aux'])
    return out.reshape(B)                                   # squeeze() glue


# -------------------------- parameters (synthetic) ------------------------ #
def init_params(key, vocab_size, embed_dim, num_filters):
    ks = jax.random.split(key, 9)
    p = {}
    p['embedding'] = 0.1 * jax.random.normal(ks[0], (vocab_size, embed_dim),
                                             jnp.float32)
    for i, k in enumerate(FILTER_SIZES):
        bound = 1.0 / jnp.sqrt(embed_dim * k)
        # PyTorch Conv1d layout: (out_channels=F, in_channels=E, k)
        p[f'conv{k}_w'] = jax.random.uniform(
            ks[1 + 2 * i], (num_filters, embed_dim, k), jnp.float32,
            minval=-bound, maxval=bound)
        p[f'conv{k}_b'] = jax.random.uniform(
            ks[2 + 2 * i], (num_filters,), jnp.float32,
            minval=-bound, maxval=bound)
    bound = 1.0 / jnp.sqrt(len(FILTER_SIZES) * num_filters)
    p['fc_w'] = jax.random.uniform(ks[7], (1, len(FILTER_SIZES) * num_filters),
                                   jnp.float32, minval=-bound, maxval=bound)
    p['fc_b'] = jax.random.uniform(ks[8], (1,), jnp.float32,
                                   minval=-bound, maxval=bound)
    return p


def to_kernel_layout(p):
    """bf16 table; taps stacked into (E, sum(k)*F_pad) with each tap block
    zero-padded to a 128-lane boundary; biases/FC rows merged into (8,F_pad)."""
    F, E, _ = p[f'conv{FILTER_SIZES[0]}_w'].shape
    f_pad = _round_up(F, LANE)
    kp = {'num_filters': F, 'f_pad': f_pad}
    kp['embedding_bf16'] = p['embedding'].astype(jnp.bfloat16)

    cols = []
    for k in FILTER_SIZES:
        w = p[f'conv{k}_w']                                # (F, E, k) torch layout
        wt = jnp.transpose(w, (1, 2, 0))                   # (E, k, F)
        wt = jnp.pad(wt, ((0, 0), (0, 0), (0, f_pad - F))) # lane-pad each tap
        # column j*f_pad + f holds w[f, :, j]: tap j is a 128-aligned lane slab
        cols.append(wt.reshape(E, k * f_pad))
    kp['w_all'] = jnp.concatenate(cols, axis=1).astype(jnp.bfloat16)

    aux = jnp.zeros((8, f_pad), jnp.float32)
    for i, k in enumerate(FILTER_SIZES):
        aux = aux.at[i, :F].set(p[f'conv{k}_b'])           # rows 0-2: conv bias
        aux = aux.at[3 + i, :F].set(p['fc_w'][0, i * F:(i + 1) * F])  # 3-5: fc
    aux = aux.at[6, 0].set(p['fc_b'][0])                   # row 6: fc bias
    kp['aux'] = aux
    return kp


# --------------------------- plain-JAX reference --------------------------- #
def reference_forward(tokens, p):
    emb = p['embedding'][tokens]                           # (B, L, E)
    x = jnp.transpose(emb, (0, 2, 1))                      # (B, E, L) like torch
    pooled = []
    for k in FILTER_SIZES:
        w = p[f'conv{k}_w']                                # (F, E, k)
        b = p[f'conv{k}_b']
        y = jax.lax.conv_general_dilated(
            x, w, window_strides=(1,), padding='VALID',
            dimension_numbers=('NCH', 'OIH', 'NCH'))
        y = jax.nn.relu(y + b[None, :, None])
        pooled.append(jnp.max(y, axis=2))
    feat = jnp.concatenate(pooled, axis=1)
    logit = feat @ p['fc_w'].T + p['fc_b']
    return jax.nn.sigmoid(logit).squeeze()


# ----------------------------------- main ---------------------------------- #
if __name__ == "__main__":
    VOCAB, EMBED, NUM_FILTERS = 50, 32, 16
    B, L = 16, 16

    key = jax.random.PRNGKey(0)
    k_param, k_tok = jax.random.split(key)

    params = init_params(k_param, VOCAB, EMBED, NUM_FILTERS)
    kparams = to_kernel_layout(params)

    tokens = jax.random.randint(k_tok, (B, L), 0, VOCAB)   # int token ids
    # Gather from the bf16 table: only token ids + bf16 rows cross HBM,
    # no f32 embedding materialization or wrapper-side cast.
    token_emb = kparams['embedding_bf16'][tokens]          # (B, L, E) bf16 glue

    out = textcnn_forward(token_emb, kparams)              # auto b_tile, nb >= 2
    out = jax.block_until_ready(out)

    ref = reference_forward(tokens, params)
    assert out.shape == (B,), out.shape
    # bf16 matmul operands (f32 accumulation) -> loosened tolerance.
    assert jnp.allclose(out, ref, atol=1e-2), (out, ref)

    print("KERNEL_OK")
</pallas_src>

<mosaic_0001>
module attributes {stable_mosaic.version = 11 : i64} {
  func.func @textcnn_kernel(%arg0: i32, %arg1: memref<128x32xbf16, #tpu.memory_space<vmem>>, %arg2: memref<32x1536xbf16, #tpu.memory_space<vmem>>, %arg3: memref<8x128xf32, #tpu.memory_space<vmem>>, %arg4: memref<1x1x8xf32, #tpu.memory_space<vmem>>) attributes {dimension_semantics = [#tpu.dimension_semantics<parallel>], iteration_bounds = array<i64: 2>, scalar_prefetch = 0 : i64, scratch_operands = 0 : i64, tpu.core_type = #tpu.core_type<tc>, window_params = [{transform_indices = @transform_0, window_bounds = array<i64: 128, 32>}, {pipeline_mode = #tpu.pipeline_mode<synchronous>, transform_indices = @transform_1, window_bounds = array<i64: 32, 1536>}, {pipeline_mode = #tpu.pipeline_mode<synchronous>, transform_indices = @transform_2, window_bounds = array<i64: 8, 128>}, {transform_indices = @transform_3, window_bounds = array<i64: 1, 1, 8>}]} {
    %c0 = arith.constant 0 : index
    %c0_0 = arith.constant 0 : index
    %0 = vector.load %arg1[%c0, %c0_0] : memref<128x32xbf16, #tpu.memory_space<vmem>>, vector<128x32xbf16>
    %c0_1 = arith.constant 0 : index
    %c0_2 = arith.constant 0 : index
    %1 = vector.load %arg2[%c0_1, %c0_2] : memref<32x1536xbf16, #tpu.memory_space<vmem>>, vector<32x1536xbf16>
    %cst = arith.constant dense<0.000000e+00> : vector<128x1536xf32>
    %2 = tpu.matmul %0, %1, %cst {dimension_numbers = #tpu.dot_dimension_numbers<[1], [0], [0], [1], [0, 0, 1, 1], [], []>} : vector<128x32xbf16>, vector<32x1536xbf16>, vector<128x1536xf32> -> vector<128x1536xf32>
    %3 = vector.shape_cast %2 : vector<128x1536xf32> to vector<8x16x1536xf32>
    %4 = vector.extract_strided_slice %3 {offsets = [0, 0, 0], sizes = [8, 14, 128], strides = [1, 1, 1]} : vector<8x16x1536xf32> to vector<8x14x128xf32>
    %5 = vector.extract_strided_slice %3 {offsets = [0, 1, 128], sizes = [8, 14, 128], strides = [1, 1, 1]} : vector<8x16x1536xf32> to vector<8x14x128xf32>
    %6 = arith.addf %4, %5 : vector<8x14x128xf32>
    %7 = vector.extract_strided_slice %3 {offsets = [0, 2, 256], sizes = [8, 14, 128], strides = [1, 1, 1]} : vector<8x16x1536xf32> to vector<8x14x128xf32>
    %8 = arith.addf %6, %7 : vector<8x14x128xf32>
    %cst_3 = arith.constant dense<0xFF800000> : vector<8x128xf32>
    %9 = vector.multi_reduction <maximumf>, %8, %cst_3 [1] : vector<8x14x128xf32> to vector<8x128xf32>
    %c0_4 = arith.constant 0 : index
    %c0_5 = arith.constant 0 : index
    %10 = vector.load %arg3[%c0_4, %c0_5] : memref<8x128xf32, #tpu.memory_space<vmem>>, vector<1x128xf32>
    %11 = vector.broadcast %10 : vector<1x128xf32> to vector<8x128xf32>
    %12 = arith.addf %9, %11 : vector<8x128xf32>
    %cst_6 = arith.constant 0.000000e+00 : f32
    %13 = vector.broadcast %cst_6 : f32 to vector<8x128xf32>
    %14 = arith.maximumf %12, %13 : vector<8x128xf32>
    %c3 = arith.constant 3 : index
    %c0_7 = arith.constant 0 : index
    %15 = vector.load %arg3[%c3, %c0_7] : memref<8x128xf32, #tpu.memory_space<vmem>>, vector<1x128xf32>
    %cst_8 = arith.constant dense<0.000000e+00> : vector<1x8xf32>
    %16 = tpu.matmul %15, %14, %cst_8 {dimension_numbers = #tpu.dot_dimension_numbers<[1], [1], [0], [0], [0, 0, 1, 0], [], []>} : vector<1x128xf32>, vector<8x128xf32>, vector<1x8xf32> -> vector<1x8xf32>
    %17 = vector.extract_strided_slice %3 {offsets = [0, 0, 384], sizes = [8, 13, 128], strides = [1, 1, 1]} : vector<8x16x1536xf32> to vector<8x13x128xf32>
    %18 = vector.extract_strided_slice %3 {offsets = [0, 1, 512], sizes = [8, 13, 128], strides = [1, 1, 1]} : vector<8x16x1536xf32> to vector<8x13x128xf32>
    %19 = arith.addf %17, %18 : vector<8x13x128xf32>
    %20 = vector.extract_strided_slice %3 {offsets = [0, 2, 640], sizes = [8, 13, 128], strides = [1, 1, 1]} : vector<8x16x1536xf32> to vector<8x13x128xf32>
    %21 = arith.addf %19, %20 : vector<8x13x128xf32>
    %22 = vector.extract_strided_slice %3 {offsets = [0, 3, 768], sizes = [8, 13, 128], strides = [1, 1, 1]} : vector<8x16x1536xf32> to vector<8x13x128xf32>
    %23 = arith.addf %21, %22 : vector<8x13x128xf32>
    %cst_9 = arith.constant dense<0xFF800000> : vector<8x128xf32>
    %24 = vector.multi_reduction <maximumf>, %23, %cst_9 [1] : vector<8x13x128xf32> to vector<8x128xf32>
    %c1 = arith.constant 1 : index
    %c0_10 = arith.constant 0 : index
    %25 = vector.load %arg3[%c1, %c0_10] : memref<8x128xf32, #tpu.memory_space<vmem>>, vector<1x128xf32>
    %26 = vector.broadcast %25 : vector<1x128xf32> to vector<8x128xf32>
    %27 = arith.addf %24, %26 : vector<8x128xf32>
    %cst_11 = arith.constant 0.000000e+00 : f32
    %28 = vector.broadcast %cst_11 : f32 to vector<8x128xf32>
    %29 = arith.maximumf %27, %28 : vector<8x128xf32>
    %c4 = arith.constant 4 : index
    %c0_12 = arith.constant 0 : index
    %30 = vector.load %arg3[%c4, %c0_12] : memref<8x128xf32, #tpu.memory_space<vmem>>, vector<1x128xf32>
    %cst_13 = arith.constant dense<0.000000e+00> : vector<1x8xf32>
    %31 = tpu.matmul %30, %29, %cst_13 {dimension_numbers = #tpu.dot_dimension_numbers<[1], [1], [0], [0], [0, 0, 1, 0], [], []>} : vector<1x128xf32>, vector<8x128xf32>, vector<1x8xf32> -> vector<1x8xf32>
    %32 = arith.addf %16, %31 : vector<1x8xf32>
    %33 = vector.extract_strided_slice %3 {offsets = [0, 0, 896], sizes = [8, 12, 128], strides = [1, 1, 1]} : vector<8x16x1536xf32> to vector<8x12x128xf32>
    %34 = vector.extract_strided_slice %3 {offsets = [0, 1, 1024], sizes = [8, 12, 128], strides = [1, 1, 1]} : vector<8x16x1536xf32> to vector<8x12x128xf32>
    %35 = arith.addf %33, %34 : vector<8x12x128xf32>
    %36 = vector.extract_strided_slice %3 {offsets = [0, 2, 1152], sizes = [8, 12, 128], strides = [1, 1, 1]} : vector<8x16x1536xf32> to vector<8x12x128xf32>
    %37 = arith.addf %35, %36 : vector<8x12x128xf32>
    %38 = vector.extract_strided_slice %3 {offsets = [0, 3, 1280], sizes = [8, 12, 128], strides = [1, 1, 1]} : vector<8x16x1536xf32> to vector<8x12x128xf32>
    %39 = arith.addf %37, %38 : vector<8x12x128xf32>
    %40 = vector.extract_strided_slice %3 {offsets = [0, 4, 1408], sizes = [8, 12, 128], strides = [1, 1, 1]} : vector<8x16x1536xf32> to vector<8x12x128xf32>
    %41 = arith.addf %39, %40 : vector<8x12x128xf32>
    %cst_14 = arith.constant dense<0xFF800000> : vector<8x128xf32>
    %42 = vector.multi_reduction <maximumf>, %41, %cst_14 [1] : vector<8x12x128xf32> to vector<8x128xf32>
    %c2 = arith.constant 2 : index
    %c0_15 = arith.constant 0 : index
    %43 = vector.load %arg3[%c2, %c0_15] : memref<8x128xf32, #tpu.memory_space<vmem>>, vector<1x128xf32>
    %44 = vector.broadcast %43 : vector<1x128xf32> to vector<8x128xf32>
    %45 = arith.addf %42, %44 : vector<8x128xf32>
    %cst_16 = arith.constant 0.000000e+00 : f32
    %46 = vector.broadcast %cst_16 : f32 to vector<8x128xf32>
    %47 = arith.maximumf %45, %46 : vector<8x128xf32>
    %c5 = arith.constant 5 : index
    %c0_17 = arith.constant 0 : index
    %48 = vector.load %arg3[%c5, %c0_17] : memref<8x128xf32, #tpu.memory_space<vmem>>, vector<1x128xf32>
    %cst_18 = arith.constant dense<0.000000e+00> : vector<1x8xf32>
    %49 = tpu.matmul %48, %47, %cst_18 {dimension_numbers = #tpu.dot_dimension_numbers<[1], [1], [0], [0], [0, 0, 1, 0], [], []>} : vector<1x128xf32>, vector<8x128xf32>, vector<1x8xf32> -> vector<1x8xf32>
    %50 = arith.addf %32, %49 : vector<1x8xf32>
    %c6 = arith.constant 6 : index
    %c0_19 = arith.constant 0 : index
    %51 = vector.load %arg3[%c6, %c0_19] : memref<8x128xf32, #tpu.memory_space<vmem>>, vector<1x1xf32>
    %52 = vector.broadcast %51 : vector<1x1xf32> to vector<1x8xf32>
    %53 = arith.addf %50, %52 : vector<1x8xf32>
    %54 = arith.negf %53 : vector<1x8xf32>
    %55 = math.exp %54 : vector<1x8xf32>
    %cst_20 = arith.constant 1.000000e+00 : f32
    %56 = vector.broadcast %cst_20 : f32 to vector<1x8xf32>
    %57 = arith.addf %56, %55 : vector<1x8xf32>
    %58 = arith.divf %56, %57 : vector<1x8xf32>
    %c0_21 = arith.constant 0 : index
    %c0_22 = arith.constant 0 : index
    %c0_23 = arith.constant 0 : index
    %59 = vector.load %arg4[%c0_21, %c0_22, %c0_23] : memref<1x1x8xf32, #tpu.memory_space<vmem>>, vector<1x1x8xf32>
    %60 = vector.shape_cast %59 : vector<1x1x8xf32> to vector<1x8xf32>
    %61 = vector.shape_cast %58 : vector<1x8xf32> to vector<1x1x8xf32>
    tpu.vector_store %arg4[%c0_21, %c0_22, %c0_23], %61 {strides = array<i32>} : memref<1x1x8xf32, #tpu.memory_space<vmem>>, vector<1x1x8xf32>,
    return
  }
  func.func @transform_0(%arg0: i32) -> (i32, i32) {
    %c0_i32 = arith.constant 0 : i32
    %c0_i32_0 = arith.constant 0 : i32
    return %arg0, %c0_i32 : i32, i32
  }
  func.func @transform_1(%arg0: i32) -> (i32, i32) {
    %c0_i32 = arith.constant 0 : i32
    %c0_i32_0 = arith.constant 0 : i32
    %c0_i32_1 = arith.constant 0 : i32
    return %c0_i32, %c0_i32_0 : i32, i32
  }
  func.func @transform_2(%arg0: i32) -> (i32, i32) {
    %c0_i32 = arith.constant 0 : i32
    %c0_i32_0 = arith.constant 0 : i32
    %c0_i32_1 = arith.constant 0 : i32
    return %c0_i32, %c0_i32_0 : i32, i32
  }
  func.func @transform_3(%arg0: i32) -> (i32, i32, i32) {
    %c0_i32 = arith.constant 0 : i32
    %c0_i32_0 = arith.constant 0 : i32
    %c0_i32_1 = arith.constant 0 : i32
    return %arg0, %c0_i32, %c0_i32_0 : i32, i32, i32
  }
}

</mosaic_0001>

<llo_original>
// kernel: tpu_custom_call.1
$region0: #{tpu_custom_call.1}
  #allocation0 [shape = 'u32[]', space=smem, size = 0x4, offset = 0x4, fixed_abs, tag = 'smem constant byte address 0x4 - core index']
  #allocation1 [shape = 'u32[72,128]{1,0:T(1,128)}', space=vmem, size = 0x9000, scoped, tag = 'internal scratch']
  %s0 = inlined_call_operand.vmem [shape: bf16[256,32], index: 0, kind: input, shape index: {}]
  %s1 = inlined_call_operand.hbm [shape: bf16[32,1536], index: 1, kind: input, shape index: {}]
  %s2 = inlined_call_operand.vmem [shape: f32[8,128], index: 2, kind: input, shape index: {}]
  %s3 = inlined_call_operand.hbm [shape: f32[2,1,8], index: 3, kind: output, shape index: {}]
  %s4 = sld [smem:[#allocation0]]
  $region49: #{tpu_custom_call.1} parent=0
    _
  %s6 = ssub.s32 1, %s4
  %s7 = scalar_select 0, %s6, %s4
  $region1: #{tpu_custom_call.1} parent=0
    #allocation2 [shape = 'u8[98304]{0}', space=vmem, size = 0x18000, scoped, tag = 'input window, operand 1, single buffered']
    #allocation3 [shape = 's32[2]{0}', space=sflag, size = 0x8, scoped, tag = 'scoped memory for tpu_custom_call.1']
    #allocation4 [shape = 's32[2]{0}', space=sflag, size = 0x8, scoped, tag = 'scoped memory for tpu_custom_call.1']
    #allocation5 [shape = 'u8[1024]{0}', space=vmem, size = 0x400, scoped, tag = 'output window, operand 0']
    %8 = vsyncpa [#allocation3], 0
    %9 = vsyncpa [#allocation4], 0
    %s10 = scalar_lea.sflag [#allocation4], 1
    %11 = vsyncpa %s10, 0
    loop: start=0, step=1, limit=4
    $region2: #{tpu_custom_call.1} parent=1 // loop_pre_header
      _
    $region3: #{tpu_custom_call.1} parent=1 // loop_header
      %s13 = sphi 0, %s17
      %p14 = scmp.ge.s32.totalorder %s13, 4
      %s23 = sphi 0, %s25
      %s26 = sphi 0, %s23
      %s27 = sphi 0, %s26
      %s43 = sphi 0, %s27
      %s47 = sphi 0, %s47
      %s49 = sphi 0, %s47
      %s50 = sphi 0, %s49
      %s64 = sphi 0, %s50
      %s68 = sphi 0, %s68
      %s70 = sphi 0, %s68
      %s71 = sphi 0, %s70
      %s85 = sphi 0, %s71
      %s91 = sphi 0, %s93
      %s94 = sphi 0, %s91
      %s95 = sphi 0, %s94
      %s111 = sphi 0, %s95
    $region4: #{tpu_custom_call.1} parent=1 // loop_header_branch
      %16 = sbr.rel (%p14) target = $region8
    $region5: #{tpu_custom_call.1} parent=1 // loop_body
      %s18 = ssub.s32 %s13, 1
      %s19 = ssub.s32 %s13, 2
      %s20 = sadd.s32 %s13, 1
      %s21 = ssub.s32 %s13, %s20
      %p22 = scmp.eq.s32.totalorder %s21, 0
      %s24 = sadd.s32 %s23, 1
      %s25 = scalar_select %p22, %s23, %s24
      %p28 = pneg %p22
      %p29 = scmp.eq.s32.totalorder %s13, 1
      %p30 = por %p28, %p29
      %p31 = scmp.ne.s32.totalorder %s23, %s26
      %p32 = scmp.eq.s32.totalorder %s13, 0
      %p33 = por %p31, %p32
      %p34 = scmp.ne.s32.totalorder %s23, %s26
      %p35 = scmp.eq.s32.totalorder %s18, 1
      %p36 = por %p34, %p35
      %p37 = scmp.ne.s32.totalorder %s26, %s27
      %p38 = scmp.eq.s32.totalorder %s18, 0
      %p39 = por %p37, %p38
      %p40 = scmp.ne.s32.totalorder %s26, %s27
      %p41 = scmp.eq.s32.totalorder %s19, 1
      %p42 = por %p40, %p41
      %p44 = scmp.ne.s32.totalorder %s27, %s43
      %p45 = scmp.eq.s32.totalorder %s19, 0
      %p46 = por %p44, %p45
      %s48 = sadd.s32 %s47, 1
      %p51 = scmp.eq.s32.totalorder %s13, 1
      %p52 = scmp.ne.s32.totalorder %s47, %s49
      %p53 = scmp.eq.s32.totalorder %s13, 0
      %p54 = por %p52, %p53
      %p55 = scmp.ne.s32.totalorder %s47, %s49
      %p56 = scmp.eq.s32.totalorder %s18, 1
      %p57 = por %p55, %p56
      %p58 = scmp.ne.s32.totalorder %s49, %s50
      %p59 = scmp.eq.s32.totalorder %s18, 0
      %p60 = por %p58, %p59
      %p61 = scmp.ne.s32.totalorder %s49, %s50
      %p62 = scmp.eq.s32.totalorder %s19, 1
      %p63 = por %p61, %p62
      %p65 = scmp.ne.s32.totalorder %s50, %s64
      %p66 = scmp.eq.s32.totalorder %s19, 0
      %p67 = por %p65, %p66
      %s69 = sadd.s32 %s68, 1
      %p72 = scmp.eq.s32.totalorder %s13, 1
      %p73 = scmp.ne.s32.totalorder %s68, %s70
      %p74 = scmp.eq.s32.totalorder %s13, 0
      %p75 = por %p73, %p74
      %p76 = scmp.ne.s32.totalorder %s68, %s70
      %p77 = scmp.eq.s32.totalorder %s18, 1
      %p78 = por %p76, %p77
      %p79 = scmp.ne.s32.totalorder %s70, %s71
      %p80 = scmp.eq.s32.totalorder %s18, 0
      %p81 = por %p79, %p80
      %p82 = scmp.ne.s32.totalorder %s70, %s71
      %p83 = scmp.eq.s32.totalorder %s19, 1
      %p84 = por %p82, %p83
      %p86 = scmp.ne.s32.totalorder %s71, %s85
      %p87 = scmp.eq.s32.totalorder %s19, 0
      %p88 = por %p86, %p87
      %s89 = ssub.s32 %s13, %s20
      %p90 = scmp.eq.s32.totalorder %s89, 0
      %s92 = sadd.s32 %s91, 1
      %s93 = scalar_select %p90, %s91, %s92
      %p96 = pneg %p90
      %p97 = scmp.eq.s32.totalorder %s13, 1
      %p98 = por %p96, %p97
      %p99 = scmp.ne.s32.totalorder %s91, %s94
      %p100 = scmp.eq.s32.totalorder %s13, 0
      %p101 = por %p99, %p100
      %p102 = scmp.ne.s32.totalorder %s91, %s94
      %p103 = scmp.eq.s32.totalorder %s18, 1
      %p104 = por %p102, %p103
      %p105 = scmp.ne.s32.totalorder %s94, %s95
      %p106 = scmp.eq.s32.totalorder %s18, 0
      %p107 = por %p105, %p106
      %p108 = scmp.ne.s32.totalorder %s94, %s95
      %p109 = scmp.eq.s32.totalorder %s19, 1
      %p110 = por %p108, %p109
      %p112 = scmp.ne.s32.totalorder %s95, %s111
      %p113 = scmp.eq.s32.totalorder %s19, 0
      %p114 = por %p112, %p113
      %p115 = scmp.le.s32.totalorder 1, %s13
      %p116 = scmp.lt.s32.totalorder %s13, 3
      %p117 = pnand %p115, %p116
      %p118 = pneg %p117
      // Predicated region
      $region9: #{tpu_custom_call.1} parent=5 // pred_check
        _
      $region10: #{tpu_custom_call.1} parent=5 // pred_check_branch
        %120 = sbr.rel (%p117) target = $region12
      $region11: #{tpu_custom_call.1} parent=5 // pred_region
        %s121 = ssub.s32 %s13, 1
        // Predicated region
        $region13: #{tpu_custom_call.1} parent=11 // pred_check
          %p122 = pneg %p60
        $region14: #{tpu_custom_call.1} parent=11 // pred_check_branch
          %124 = sbr.rel (%p122) target = $region16
        $region15: #{tpu_custom_call.1} parent=11 // pred_region
          %126 = vsyncadd [#allocation3], 0
          %s127 = sshll.u32 %s1, 4
          %s128 = int_to_ptr.hbm [resolvable:$true] %s127
          %s129 = sshll.u32 [#allocation2], 4
          %s130 = int_to_ptr.vmem [resolvable:$true] %s129
          %135 = dma.hbm_to_vmem [thread:$0]  %s128, 3072, %s130, [#allocation3], 768, 768, 48
        $region16: #{tpu_custom_call.1} parent=11 // pred_fallthru
          _
        // Predicated region
        $region17: #{tpu_custom_call.1} parent=11 // pred_check
          %p136 = pneg %p81
        $region18: #{tpu_custom_call.1} parent=11 // pred_check_branch
          %138 = sbr.rel (%p136) target = $region20
        $region19: #{tpu_custom_call.1} parent=11 // pred_region
          _
        $region20: #{tpu_custom_call.1} parent=11 // pred_fallthru
          _
      $region12: #{tpu_custom_call.1} parent=5 // pred_fallthru
        _
      %p139 = scmp.lt.s32.totalorder %s13, 2
      // Predicated region
      $region21: #{tpu_custom_call.1} parent=5 // pred_check
        %p140 = pneg %p139
      $region22: #{tpu_custom_call.1} parent=5 // pred_check_branch
        %142 = sbr.rel (%p140) target = $region24
      $region23: #{tpu_custom_call.1} parent=5 // pred_region
        // Predicated region
        $region25: #{tpu_custom_call.1} parent=23 // pred_check
          %p143 = pneg %p33
        $region26: #{tpu_custom_call.1} parent=23 // pred_check_branch
          %145 = sbr.rel (%p143) target = $region28
        $region27: #{tpu_custom_call.1} parent=23 // pred_region
          %s146 = smul.u32 16, %s13
          %p147 = scmp.lt.s32.totalorder %s146, 31
          %s148 = scalar_select %p147, %s146, 31
          %s149 = smul.addr %s148, 4
          %s150 = scalar_lea.vmem %s0, %s149
          %s151 = smul.u32 16, %s13
        $region28: #{tpu_custom_call.1} parent=23 // pred_fallthru
          _
      $region24: #{tpu_custom_call.1} parent=5 // pred_fallthru
        _
      %p152 = scmp.le.s32.totalorder 1, %s13
      %p153 = scmp.lt.s32.totalorder %s13, 3
      %p154 = pnand %p152, %p153
      %p155 = pneg %p154
      // Predicated region
      $region29: #{tpu_custom_call.1} parent=5 // pred_check
        _
      $region30: #{tpu_custom_call.1} parent=5 // pred_check_branch
        %157 = sbr.rel (%p154) target = $region32
      $region31: #{tpu_custom_call.1} parent=5 // pred_region
        %s158 = ssub.s32 %s13, 1
        // Predicated region
        $region33: #{tpu_custom_call.1} parent=31 // pred_check
          %p159 = pneg %p60
        $region34: #{tpu_custom_call.1} parent=31 // pred_check_branch
          %161 = sbr.rel (%p159) target = $region36
        $region35: #{tpu_custom_call.1} parent=31 // pred_region
          %163 = dma.done [#allocation3], 3072
        $region36: #{tpu_custom_call.1} parent=31 // pred_fallthru
          _
        %s164 = smul.u32 16, %s18
        %p165 = scmp.lt.s32.totalorder %s164, 31
        %s166 = scalar_select %p165, %s164, 31
        %s167 = smul.addr %s166, 4
        %s168 = scalar_lea.vmem %s0, %s167
        %p169 = pneg %p39
        %p170 = pneg %p36
        %p171 = pneg %p60
        %p172 = pneg %p57
        %p173 = pneg %p81
        %p174 = pneg %p78
        %p175 = pneg %p107
        %p176 = pneg %p104
        %s177 = sand.u32 %s94, 1
        %s178 = scalar_lea.sflag [#allocation4], %s177
        %s179 = sand.u32 %s94, 1
        %s180 = scalar_lea.vmem [#allocation5], %s179
        %s181 = smul.u32 16, %s18
        %p182 = scmp.lt.s32.totalorder %s181, 31
        %s183 = scalar_select %p182, %s181, 31
        %s184 = smul.addr %s183, 4
        %s185 = scalar_lea.vmem %s0, %s184
        %s186 = smul.u32 16, %s18
        %v188 = vld [vmem:[%s185] sm:$0xf]
        %v189 = vld [vmem:[%s185 + $0x4] sm:$0xf]
        %v190 = vld [vmem:[%s185 + $0x8] sm:$0xf]
        %v191 = vld [vmem:[%s185 + $0xc] sm:$0xf]
        %v192 = vld [vmem:[%s185 + $0x10] sm:$0xf]
        %v193 = vld [vmem:[%s185 + $0x14] sm:$0xf]
        %v194 = vld [vmem:[%s185 + $0x18] sm:$0xf]
        %v195 = vld [vmem:[%s185 + $0x1c] sm:$0xf]
        %v196 = vld [vmem:[%s185 + $0x20] sm:$0xf]
        %v197 = vld [vmem:[%s185 + $0x24] sm:$0xf]
        %v198 = vld [vmem:[%s185 + $0x28] sm:$0xf]
        %v199 = vld [vmem:[%s185 + $0x2c] sm:$0xf]
        %v200 = vld [vmem:[%s185 + $0x30] sm:$0xf]
        %v201 = vld [vmem:[%s185 + $0x34] sm:$0xf]
        %v202 = vld [vmem:[%s185 + $0x38] sm:$0xf]
        %v203 = vld [vmem:[%s185 + $0x3c] sm:$0xf]
        %v204 = vld [vmem:[#allocation2] sm:$0xff]
        %v205 = vld [vmem:[#allocation2 + $0x8] sm:$0xff]
        %v206 = vld [vmem:[#allocation2 + $0x10] sm:$0xff]
        %v207 = vld [vmem:[#allocation2 + $0x18] sm:$0xff]
        %v208 = vld [vmem:[#allocation2 + $0x20] sm:$0xff]
        %v209 = vld [vmem:[#allocation2 + $0x28] sm:$0xff]
        %v210 = vld [vmem:[#allocation2 + $0x30] sm:$0xff]
        %v211 = vld [vmem:[#allocation2 + $0x38] sm:$0xff]
        %v212 = vld [vmem:[#allocation2 + $0x40] sm:$0xff]
        %v213 = vld [vmem:[#allocation2 + $0x48] sm:$0xff]
        %v214 = vld [vmem:[#allocation2 + $0x50] sm:$0xff]
        %v215 = vld [vmem:[#allocation2 + $0x58] sm:$0xff]
        %v216 = vld [vmem:[#allocation2 + $0x60] sm:$0xff]
        %v217 = vld [vmem:[#allocation2 + $0x68] sm:$0xff]
        %v218 = vld [vmem:[#allocation2 + $0x70] sm:$0xff]
        %v219 = vld [vmem:[#allocation2 + $0x78] sm:$0xff]
        %v220 = vld [vmem:[#allocation2 + $0x80] sm:$0xff]
        %v221 = vld [vmem:[#allocation2 + $0x88] sm:$0xff]
        %v222 = vld [vmem:[#allocation2 + $0x90] sm:$0xff]
        %v223 = vld [vmem:[#allocation2 + $0x98] sm:$0xff]
        %v224 = vld [vmem:[#allocation2 + $0xa0] sm:$0xff]
        %v225 = vld [vmem:[#allocation2 + $0xa8] sm:$0xff]
        %v226 = vld [vmem:[#allocation2 + $0xb0] sm:$0xff]
        %v227 = vld [vmem:[#allocation2 + $0xb8] sm:$0xff]
        %v244 = vunpack.c.l.b16 %v188
        %v245 = vunpack.c.l.b16 %v189
        %v246 = vunpack.c.l.b16 %v190
        %v247 = vunpack.c.l.b16 %v191
        %v248 = vunpack.c.l.b16 %v192
        %v249 = vunpack.c.l.b16 %v193
        %v250 = vunpack.c.l.b16 %v194
        %v251 = vunpack.c.l.b16 %v195
        %v252 = vunpack.c.l.b16 %v196
        %v253 = vunpack.c.l.b16 %v197
        %v254 = vunpack.c.l.b16 %v198
        %v255 = vunpack.c.l.b16 %v199
        %v256 = vunpack.c.l.b16 %v200
        %v257 = vunpack.c.l.b16 %v201
        %v258 = vunpack.c.l.b16 %v202
        %v259 = vunpack.c.l.b16 %v203
        %v260 = vpack.c.b16 %v245, %v244
        %v261 = vpack.c.b16 %v247, %v246
        %v262 = vpack.c.b16 %v249, %v248
        %v263 = vpack.c.b16 %v251, %v250
        %v264 = vpack.c.b16 %v253, %v252
        %v265 = vpack.c.b16 %v255, %v254
        %v266 = vpack.c.b16 %v257, %v256
        %v267 = vpack.c.b16 %v259, %v258
        %v292 = vunpack.c.l.b16 %v204
        %v293 = vunpack.c.h.b16 %v204
        %v294 = vunpack.c.l.b16 %v205
        %v295 = vunpack.c.h.b16 %v205
        %v296 = vunpack.c.l.b16 %v206
        %v297 = vunpack.c.h.b16 %v206
        %v298 = vunpack.c.l.b16 %v207
        %v299 = vunpack.c.h.b16 %v207
        %v300 = vunpack.c.l.b16 %v208
        %v301 = vunpack.c.h.b16 %v208
        %v302 = vunpack.c.l.b16 %v209
        %v303 = vunpack.c.h.b16 %v209
        %v304 = vunpack.c.l.b16 %v210
        %v305 = vunpack.c.h.b16 %v210
        %v306 = vunpack.c.l.b16 %v211
        %v307 = vunpack.c.h.b16 %v211
        %v308 = vunpack.c.l.b16 %v212
        %v309 = vunpack.c.h.b16 %v212
        %v310 = vunpack.c.l.b16 %v213
        %v311 = vunpack.c.h.b16 %v213
        %v312 = vunpack.c.l.b16 %v214
        %v313 = vunpack.c.h.b16 %v214
        %v314 = vunpack.c.l.b16 %v215
        %v315 = vunpack.c.h.b16 %v215
        %v316 = vunpack.c.l.b16 %v216
        %v317 = vunpack.c.h.b16 %v216
        %v318 = vunpack.c.l.b16 %v217
        %v319 = vunpack.c.h.b16 %v217
        %v320 = vunpack.c.l.b16 %v218
        %v321 = vunpack.c.h.b16 %v218
        %v322 = vunpack.c.l.b16 %v219
        %v323 = vunpack.c.h.b16 %v219
        %v324 = vunpack.c.l.b16 %v220
        %v325 = vunpack.c.h.b16 %v220
        %v326 = vunpack.c.l.b16 %v221
        %v327 = vunpack.c.h.b16 %v221
        %v328 = vunpack.c.l.b16 %v222
        %v329 = vunpack.c.h.b16 %v222
        %v330 = vunpack.c.l.b16 %v223
        %v331 = vunpack.c.h.b16 %v223
        %v332 = vunpack.c.l.b16 %v224
        %v333 = vunpack.c.h.b16 %v224
        %v334 = vunpack.c.l.b16 %v225
        %v335 = vunpack.c.h.b16 %v225
        %v336 = vunpack.c.l.b16 %v226
        %v337 = vunpack.c.h.b16 %v226
        %v338 = vunpack.c.l.b16 %v227
        %v339 = vunpack.c.h.b16 %v227
        %v340 = vpack.c.b16 %v304, %v292
        %v341 = vpack.c.b16 %v305, %v293
        %v342 = vpack.c.b16 %v306, %v294
        %v343 = vpack.c.b16 %v307, %v295
        %v344 = vpack.c.b16 %v308, %v296
        %v345 = vpack.c.b16 %v309, %v297
        %v346 = vpack.c.b16 %v310, %v298
        %v347 = vpack.c.b16 %v311, %v299
        %v348 = vpack.c.b16 %v312, %v300
        %v349 = vpack.c.b16 %v313, %v301
        %v350 = vpack.c.b16 %v314, %v302
        %v351 = vpack.c.b16 %v315, %v303
        %v352 = vpack.c.b16 %v328, %v316
        %v353 = vpack.c.b16 %v329, %v317
        %v354 = vpack.c.b16 %v330, %v318
        %v355 = vpack.c.b16 %v331, %v319
        %v356 = vpack.c.b16 %v332, %v320
        %v357 = vpack.c.b16 %v333, %v321
        %v358 = vpack.c.b16 %v334, %v322
        %v359 = vpack.c.b16 %v335, %v323
        %v360 = vpack.c.b16 %v336, %v324
        %v361 = vpack.c.b16 %v337, %v325
        %v362 = vpack.c.b16 %v338, %v326
        %v363 = vpack.c.b16 %v339, %v327
        %vm388 = vcmask 261120
        %v390 = vsel %vm388, %v260, 0
        %v393 = vsel %vm388, %v261, 0
        %v396 = vsel %vm388, %v262, 0
        %v399 = vsel %vm388, %v263, 0
        %v402 = vsel %vm388, %v264, 0
        %v405 = vsel %vm388, %v265, 0
        %v408 = vsel %vm388, %v266, 0
        %v411 = vsel %vm388, %v267, 0
        %413 = vmatpush.bf16.msra.mxu0 0
        %414 = vmatpush.bf16.msra.mxu0 0
        %415 = vmatpush.bf16.msra.mxu0 0
        %416 = vmatpush.bf16.msra.mxu0 0
        %417 = vmatpush.bf16.msra.mxu0 0
        %418 = vmatpush.bf16.msra.mxu0 0
        %419 = vmatpush.bf16.msra.mxu0 %v352
        %420 = vmatpush.bf16.msra.mxu0 %v340
        %421 = vmatmul.bf16.gmra.mxu0 %v390
        %v422 = vpop.f32.mrf.mxu0
        %v423 = vadd.f32 0.0, %v422
        %v424 = vpop.f32.mrf.mxu0
        %v425 = vadd.f32 0.0, %v424
        %426 = vmatmul.bf16.gmra.mxu0 %v393
        %v427 = vpop.f32.mrf.mxu0
        %v428 = vadd.f32 0.0, %v427
        %v429 = vpop.f32.mrf.mxu0
        %v430 = vadd.f32 0.0, %v429
        %431 = vmatmul.bf16.gmra.mxu0 %v396
        %v432 = vpop.f32.mrf.mxu0
        %v433 = vadd.f32 0.0, %v432
        %v434 = vpop.f32.mrf.mxu0
        %v435 = vadd.f32 0.0, %v434
        %436 = vmatmul.bf16.gmra.mxu0 %v399
        %v437 = vpop.f32.mrf.mxu0
        %v438 = vadd.f32 0.0, %v437
        %v439 = vpop.f32.mrf.mxu0
        %v440 = vadd.f32 0.0, %v439
        %441 = vmatmul.bf16.gmra.mxu0 %v402
        %v442 = vpop.f32.mrf.mxu0
        %v443 = vadd.f32 0.0, %v442
        %v444 = vpop.f32.mrf.mxu0
        %v445 = vadd.f32 0.0, %v444
        %446 = vmatmul.bf16.gmra.mxu0 %v405
        %v447 = vpop.f32.mrf.mxu0
        %v448 = vadd.f32 0.0, %v447
        %v449 = vpop.f32.mrf.mxu0
        %v450 = vadd.f32 0.0, %v449
        %451 = vmatmul.bf16.gmra.mxu0 %v408
        %v452 = vpop.f32.mrf.mxu0
        %v453 = vadd.f32 0.0, %v452
        %v454 = vpop.f32.mrf.mxu0
        %v455 = vadd.f32 0.0, %v454
        %456 = vmatmul.bf16.gmra.mxu0 %v411
        %v457 = vpop.f32.mrf.mxu0
        %v458 = vadd.f32 0.0, %v457
        %v459 = vpop.f32.mrf.mxu0
        %v460 = vadd.f32 0.0, %v459
        %461 = vdwg.mxu0
        %462 = vmatpush.bf16.msra.mxu0 0
        %463 = vmatpush.bf16.msra.mxu0 0
        %464 = vmatpush.bf16.msra.mxu0 0
        %465 = vmatpush.bf16.msra.mxu0 0
        %466 = vmatpush.bf16.msra.mxu0 0
        %467 = vmatpush.bf16.msra.mxu0 0
        %468 = vmatpush.bf16.msra.mxu0 %v353
        %469 = vmatpush.bf16.msra.mxu0 %v341
        %470 = vmatmul.bf16.gmra.mxu0 %v390
        %v471 = vpop.f32.mrf.mxu0
        %v472 = vadd.f32 0.0, %v471
        %v473 = vpop.f32.mrf.mxu0
        %v474 = vadd.f32 0.0, %v473
        %475 = vmatmul.bf16.gmra.mxu0 %v393
        %v476 = vpop.f32.mrf.mxu0
        %v477 = vadd.f32 0.0, %v476
        %v478 = vpop.f32.mrf.mxu0
        %v479 = vadd.f32 0.0, %v478
        %480 = vmatmul.bf16.gmra.mxu0 %v396
        %v481 = vpop.f32.mrf.mxu0
        %v482 = vadd.f32 0.0, %v481
        %v483 = vpop.f32.mrf.mxu0
        %v484 = vadd.f32 0.0, %v483
        %485 = vmatmul.bf16.gmra.mxu0 %v399
        %v486 = vpop.f32.mrf.mxu0
        %v487 = vadd.f32 0.0, %v486
        %v488 = vpop.f32.mrf.mxu0
        %v489 = vadd.f32 0.0, %v488
        %490 = vmatmul.bf16.gmra.mxu0 %v402
        %v491 = vpop.f32.mrf.mxu0
        %v492 = vadd.f32 0.0, %v491
        %v493 = vpop.f32.mrf.mxu0
        %v494 = vadd.f32 0.0, %v493
        %495 = vmatmul.bf16.gmra.mxu0 %v405
        %v496 = vpop.f32.mrf.mxu0
        %v497 = vadd.f32 0.0, %v496
        %v498 = vpop.f32.mrf.mxu0
        %v499 = vadd.f32 0.0, %v498
        %500 = vmatmul.bf16.gmra.mxu0 %v408
        %v501 = vpop.f32.mrf.mxu0
        %v502 = vadd.f32 0.0, %v501
        %v503 = vpop.f32.mrf.mxu0
        %v504 = vadd.f32 0.0, %v503
        %505 = vmatmul.bf16.gmra.mxu0 %v411
        %v506 = vpop.f32.mrf.mxu0
        %v507 = vadd.f32 0.0, %v506
        %v508 = vpop.f32.mrf.mxu0
        %v509 = vadd.f32 0.0, %v508
        %510 = vdwg.mxu0
        %511 = vmatpush.bf16.msra.mxu0 0
        %512 = vmatpush.bf16.msra.mxu0 0
        %513 = vmatpush.bf16.msra.mxu0 0
        %514 = vmatpush.bf16.msra.mxu0 0
        %515 = vmatpush.bf16.msra.mxu0 0
        %516 = vmatpush.bf16.msra.mxu0 0
        %517 = vmatpush.bf16.msra.mxu0 %v354
        %518 = vmatpush.bf16.msra.mxu0 %v342
        %519 = vmatmul.bf16.gmra.mxu0 %v390
        %v520 = vpop.f32.mrf.mxu0
        %v521 = vadd.f32 0.0, %v520
        %v522 = vpop.f32.mrf.mxu0
        %v523 = vadd.f32 0.0, %v522
        %524 = vmatmul.bf16.gmra.mxu0 %v393
        %v525 = vpop.f32.mrf.mxu0
        %v526 = vadd.f32 0.0, %v525
        %v527 = vpop.f32.mrf.mxu0
        %v528 = vadd.f32 0.0, %v527
        %529 = vmatmul.bf16.gmra.mxu0 %v396
        %v530 = vpop.f32.mrf.mxu0
        %v531 = vadd.f32 0.0, %v530
        %v532 = vpop.f32.mrf.mxu0
        %v533 = vadd.f32 0.0, %v532
        %534 = vmatmul.bf16.gmra.mxu0 %v399
        %v535 = vpop.f32.mrf.mxu0
        %v536 = vadd.f32 0.0, %v535
        %v537 = vpop.f32.mrf.mxu0
        %v538 = vadd.f32 0.0, %v537
        %539 = vmatmul.bf16.gmra.mxu0 %v402
        %v540 = vpop.f32.mrf.mxu0
        %v541 = vadd.f32 0.0, %v540
        %v542 = vpop.f32.mrf.mxu0
        %v543 = vadd.f32 0.0, %v542
        %544 = vmatmul.bf16.gmra.mxu0 %v405
        %v545 = vpop.f32.mrf.mxu0
        %v546 = vadd.f32 0.0, %v545
        %v547 = vpop.f32.mrf.mxu0
        %v548 = vadd.f32 0.0, %v547
        %549 = vmatmul.bf16.gmra.mxu0 %v408
        %v550 = vpop.f32.mrf.mxu0
        %v551 = vadd.f32 0.0, %v550
        %v552 = vpop.f32.mrf.mxu0
        %v553 = vadd.f32 0.0, %v552
        %554 = vmatmul.bf16.gmra.mxu0 %v411
        %v555 = vpop.f32.mrf.mxu0
        %v556 = vadd.f32 0.0, %v555
        %v557 = vpop.f32.mrf.mxu0
        %v558 = vadd.f32 0.0, %v557
        %559 = vdwg.mxu0
        %560 = vmatpush.bf16.msra.mxu0 0
        %561 = vmatpush.bf16.msra.mxu0 0
        %562 = vmatpush.bf16.msra.mxu0 0
        %563 = vmatpush.bf16.msra.mxu0 0
        %564 = vmatpush.bf16.msra.mxu0 0
        %565 = vmatpush.bf16.msra.mxu0 0
        %566 = vmatpush.bf16.msra.mxu0 %v355
        %567 = vmatpush.bf16.msra.mxu0 %v343
        %568 = vmatmul.bf16.gmra.mxu0 %v390
        %v569 = vpop.f32.mrf.mxu0
        %v570 = vadd.f32 0.0, %v569
        %v571 = vpop.f32.mrf.mxu0
        %v572 = vadd.f32 0.0, %v571
        %573 = vmatmul.bf16.gmra.mxu0 %v393
        %v574 = vpop.f32.mrf.mxu0
        %v575 = vadd.f32 0.0, %v574
        %v576 = vpop.f32.mrf.mxu0
        %v577 = vadd.f32 0.0, %v576
        %578 = vmatmul.bf16.gmra.mxu0 %v396
        %v579 = vpop.f32.mrf.mxu0
        %v580 = vadd.f32 0.0, %v579
        %v581 = vpop.f32.mrf.mxu0
        %v582 = vadd.f32 0.0, %v581
        %583 = vmatmul.bf16.gmra.mxu0 %v399
        %v584 = vpop.f32.mrf.mxu0
        %v585 = vadd.f32 0.0, %v584
        %v586 = vpop.f32.mrf.mxu0
        %v587 = vadd.f32 0.0, %v586
        %588 = vmatmul.bf16.gmra.mxu0 %v402
        %v589 = vpop.f32.mrf.mxu0
        %v590 = vadd.f32 0.0, %v589
        %v591 = vpop.f32.mrf.mxu0
        %v592 = vadd.f32 0.0, %v591
        %593 = vmatmul.bf16.gmra.mxu0 %v405
        %v594 = vpop.f32.mrf.mxu0
        %v595 = vadd.f32 0.0, %v594
        %v596 = vpop.f32.mrf.mxu0
        %v597 = vadd.f32 0.0, %v596
        %598 = vmatmul.bf16.gmra.mxu0 %v408
        %v599 = vpop.f32.mrf.mxu0
        %v600 = vadd.f32 0.0, %v599
        %v601 = vpop.f32.mrf.mxu0
        %v602 = vadd.f32 0.0, %v601
        %603 = vmatmul.bf16.gmra.mxu0 %v411
        %v604 = vpop.f32.mrf.mxu0
        %v605 = vadd.f32 0.0, %v604
        %v606 = vpop.f32.mrf.mxu0
        %v607 = vadd.f32 0.0, %v606
        %608 = vdwg.mxu0
        %609 = vmatpush.bf16.msra.mxu0 0
        %610 = vmatpush.bf16.msra.mxu0 0
        %611 = vmatpush.bf16.msra.mxu0 0
        %612 = vmatpush.bf16.msra.mxu0 0
        %613 = vmatpush.bf16.msra.mxu0 0
        %614 = vmatpush.bf16.msra.mxu0 0
        %615 = vmatpush.bf16.msra.mxu0 %v356
        %616 = vmatpush.bf16.msra.mxu0 %v344
        %617 = vmatmul.bf16.gmra.mxu0 %v390
        %v618 = vpop.f32.mrf.mxu0
        %v619 = vadd.f32 0.0, %v618
        %v620 = vpop.f32.mrf.mxu0
        %v621 = vadd.f32 0.0, %v620
        %622 = vmatmul.bf16.gmra.mxu0 %v393
        %v623 = vpop.f32.mrf.mxu0
        %v624 = vadd.f32 0.0, %v623
        %v625 = vpop.f32.mrf.mxu0
        %v626 = vadd.f32 0.0, %v625
        %627 = vmatmul.bf16.gmra.mxu0 %v396
        %v628 = vpop.f32.mrf.mxu0
        %v629 = vadd.f32 0.0, %v628
        %v630 = vpop.f32.mrf.mxu0
        %v631 = vadd.f32 0.0, %v630
        %632 = vmatmul.bf16.gmra.mxu0 %v399
        %v633 = vpop.f32.mrf.mxu0
        %v634 = vadd.f32 0.0, %v633
        %v635 = vpop.f32.mrf.mxu0
        %v636 = vadd.f32 0.0, %v635
        %637 = vmatmul.bf16.gmra.mxu0 %v402
        %v638 = vpop.f32.mrf.mxu0
        %v639 = vadd.f32 0.0, %v638
        %v640 = vpop.f32.mrf.mxu0
        %v641 = vadd.f32 0.0, %v640
        %642 = vmatmul.bf16.gmra.mxu0 %v405
        %v643 = vpop.f32.mrf.mxu0
        %v644 = vadd.f32 0.0, %v643
        %v645 = vpop.f32.mrf.mxu0
        %v646 = vadd.f32 0.0, %v645
        %647 = vmatmul.bf16.gmra.mxu0 %v408
        %v648 = vpop.f32.mrf.mxu0
        %v649 = vadd.f32 0.0, %v648
        %v650 = vpop.f32.mrf.mxu0
        %v651 = vadd.f32 0.0, %v650
        %652 = vmatmul.bf16.gmra.mxu0 %v411
        %v653 = vpop.f32.mrf.mxu0
        %v654 = vadd.f32 0.0, %v653
        %v655 = vpop.f32.mrf.mxu0
        %v656 = vadd.f32 0.0, %v655
        %657 = vdwg.mxu0
        %658 = vmatpush.bf16.msra.mxu0 0
        %659 = vmatpush.bf16.msra.mxu0 0
        %660 = vmatpush.bf16.msra.mxu0 0
        %661 = vmatpush.bf16.msra.mxu0 0
        %662 = vmatpush.bf16.msra.mxu0 0
        %663 = vmatpush.bf16.msra.mxu0 0
        %664 = vmatpush.bf16.msra.mxu0 %v357
        %665 = vmatpush.bf16.msra.mxu0 %v345
        %666 = vmatmul.bf16.gmra.mxu0 %v390
        %v667 = vpop.f32.mrf.mxu0
        %v668 = vadd.f32 0.0, %v667
        %v669 = vpop.f32.mrf.mxu0
        %v670 = vadd.f32 0.0, %v669
        %671 = vmatmul.bf16.gmra.mxu0 %v393
        %v672 = vpop.f32.mrf.mxu0
        %v673 = vadd.f32 0.0, %v672
        %v674 = vpop.f32.mrf.mxu0
        %v675 = vadd.f32 0.0, %v674
        %676 = vmatmul.bf16.gmra.mxu0 %v396
        %v677 = vpop.f32.mrf.mxu0
        %v678 = vadd.f32 0.0, %v677
        %v679 = vpop.f32.mrf.mxu0
        %v680 = vadd.f32 0.0, %v679
        %681 = vmatmul.bf16.gmra.mxu0 %v399
        %v682 = vpop.f32.mrf.mxu0
        %v683 = vadd.f32 0.0, %v682
        %v684 = vpop.f32.mrf.mxu0
        %v685 = vadd.f32 0.0, %v684
        %686 = vmatmul.bf16.gmra.mxu0 %v402
        %v687 = vpop.f32.mrf.mxu0
        %v688 = vadd.f32 0.0, %v687
        %v689 = vpop.f32.mrf.mxu0
        %v690 = vadd.f32 0.0, %v689
        %691 = vmatmul.bf16.gmra.mxu0 %v405
        %v692 = vpop.f32.mrf.mxu0
        %v693 = vadd.f32 0.0, %v692
        %v694 = vpop.f32.mrf.mxu0
        %v695 = vadd.f32 0.0, %v694
        %696 = vmatmul.bf16.gmra.mxu0 %v408
        %v697 = vpop.f32.mrf.mxu0
        %v698 = vadd.f32 0.0, %v697
        %v699 = vpop.f32.mrf.mxu0
        %v700 = vadd.f32 0.0, %v699
        %701 = vmatmul.bf16.gmra.mxu0 %v411
        %v702 = vpop.f32.mrf.mxu0
        %v703 = vadd.f32 0.0, %v702
        %v704 = vpop.f32.mrf.mxu0
        %v705 = vadd.f32 0.0, %v704
        %706 = vdwg.mxu0
        %707 = vmatpush.bf16.msra.mxu0 0
        %708 = vmatpush.bf16.msra.mxu0 0
        %709 = vmatpush.bf16.msra.mxu0 0
        %710 = vmatpush.bf16.msra.mxu0 0
        %711 = vmatpush.bf16.msra.mxu0 0
        %712 = vmatpush.bf16.msra.mxu0 0
        %713 = vmatpush.bf16.msra.mxu0 %v358
        %714 = vmatpush.bf16.msra.mxu0 %v346
        %715 = vmatmul.bf16.gmra.mxu0 %v390
        %v716 = vpop.f32.mrf.mxu0
        %v717 = vadd.f32 0.0, %v716
        %v718 = vpop.f32.mrf.mxu0
        %v719 = vadd.f32 0.0, %v718
        %720 = vmatmul.bf16.gmra.mxu0 %v393
        %v721 = vpop.f32.mrf.mxu0
        %v722 = vadd.f32 0.0, %v721
        %v723 = vpop.f32.mrf.mxu0
        %v724 = vadd.f32 0.0, %v723
        %725 = vmatmul.bf16.gmra.mxu0 %v396
        %v726 = vpop.f32.mrf.mxu0
        %v727 = vadd.f32 0.0, %v726
        %v728 = vpop.f32.mrf.mxu0
        %v729 = vadd.f32 0.0, %v728
        %730 = vmatmul.bf16.gmra.mxu0 %v399
        %v731 = vpop.f32.mrf.mxu0
        %v732 = vadd.f32 0.0, %v731
        %v733 = vpop.f32.mrf.mxu0
        %v734 = vadd.f32 0.0, %v733
        %735 = vmatmul.bf16.gmra.mxu0 %v402
        %v736 = vpop.f32.mrf.mxu0
        %v737 = vadd.f32 0.0, %v736
        %v738 = vpop.f32.mrf.mxu0
        %v739 = vadd.f32 0.0, %v738
        %740 = vmatmul.bf16.gmra.mxu0 %v405
        %v741 = vpop.f32.mrf.mxu0
        %v742 = vadd.f32 0.0, %v741
        %v743 = vpop.f32.mrf.mxu0
        %v744 = vadd.f32 0.0, %v743
        %745 = vmatmul.bf16.gmra.mxu0 %v408
        %v746 = vpop.f32.mrf.mxu0
        %v747 = vadd.f32 0.0, %v746
        %v748 = vpop.f32.mrf.mxu0
        %v749 = vadd.f32 0.0, %v748
        %750 = vmatmul.bf16.gmra.mxu0 %v411
        %v751 = vpop.f32.mrf.mxu0
        %v752 = vadd.f32 0.0, %v751
        %v753 = vpop.f32.mrf.mxu0
        %v754 = vadd.f32 0.0, %v753
        %755 = vdwg.mxu0
        %756 = vmatpush.bf16.msra.mxu0 0
        %757 = vmatpush.bf16.msra.mxu0 0
        %758 = vmatpush.bf16.msra.mxu0 0
        %759 = vmatpush.bf16.msra.mxu0 0
        %760 = vmatpush.bf16.msra.mxu0 0
        %761 = vmatpush.bf16.msra.mxu0 0
        %762 = vmatpush.bf16.msra.mxu0 %v359
        %763 = vmatpush.bf16.msra.mxu0 %v347
        %764 = vmatmul.bf16.gmra.mxu0 %v390
        %v765 = vpop.f32.mrf.mxu0
        %v766 = vadd.f32 0.0, %v765
        %v767 = vpop.f32.mrf.mxu0
        %v768 = vadd.f32 0.0, %v767
        %769 = vmatmul.bf16.gmra.mxu0 %v393
        %v770 = vpop.f32.mrf.mxu0
        %v771 = vadd.f32 0.0, %v770
        %v772 = vpop.f32.mrf.mxu0
        %v773 = vadd.f32 0.0, %v772
        %774 = vmatmul.bf16.gmra.mxu0 %v396
        %v775 = vpop.f32.mrf.mxu0
        %v776 = vadd.f32 0.0, %v775
        %v777 = vpop.f32.mrf.mxu0
        %v778 = vadd.f32 0.0, %v777
        %779 = vmatmul.bf16.gmra.mxu0 %v399
        %v780 = vpop.f32.mrf.mxu0
        %v781 = vadd.f32 0.0, %v780
        %v782 = vpop.f32.mrf.mxu0
        %v783 = vadd.f32 0.0, %v782
        %784 = vmatmul.bf16.gmra.mxu0 %v402
        %v785 = vpop.f32.mrf.mxu0
        %v786 = vadd.f32 0.0, %v785
        %v787 = vpop.f32.mrf.mxu0
        %v788 = vadd.f32 0.0, %v787
        %789 = vmatmul.bf16.gmra.mxu0 %v405
        %v790 = vpop.f32.mrf.mxu0
        %v791 = vadd.f32 0.0, %v790
        %v792 = vpop.f32.mrf.mxu0
        %v793 = vadd.f32 0.0, %v792
        %794 = vmatmul.bf16.gmra.mxu0 %v408
        %v795 = vpop.f32.mrf.mxu0
        %v796 = vadd.f32 0.0, %v795
        %v797 = vpop.f32.mrf.mxu0
        %v798 = vadd.f32 0.0, %v797
        %799 = vmatmul.bf16.gmra.mxu0 %v411
        %v800 = vpop.f32.mrf.mxu0
        %v801 = vadd.f32 0.0, %v800
        %v802 = vpop.f32.mrf.mxu0
        %v803 = vadd.f32 0.0, %v802
        %804 = vdwg.mxu0
        %805 = vmatpush.bf16.msra.mxu0 0
        %806 = vmatpush.bf16.msra.mxu0 0
        %807 = vmatpush.bf16.msra.mxu0 0
        %808 = vmatpush.bf16.msra.mxu0 0
        %809 = vmatpush.bf16.msra.mxu0 0
        %810 = vmatpush.bf16.msra.mxu0 0
        %811 = vmatpush.bf16.msra.mxu0 %v360
        %812 = vmatpush.bf16.msra.mxu0 %v348
        %813 = vmatmul.bf16.gmra.mxu0 %v390
        %v814 = vpop.f32.mrf.mxu0
        %v815 = vadd.f32 0.0, %v814
        %v816 = vpop.f32.mrf.mxu0
        %v817 = vadd.f32 0.0, %v816
        %818 = vmatmul.bf16.gmra.mxu0 %v393
        %v819 = vpop.f32.mrf.mxu0
        %v820 = vadd.f32 0.0, %v819
        %v821 = vpop.f32.mrf.mxu0
        %v822 = vadd.f32 0.0, %v821
        %823 = vmatmul.bf16.gmra.mxu0 %v396
        %v824 = vpop.f32.mrf.mxu0
        %v825 = vadd.f32 0.0, %v824
        %v826 = vpop.f32.mrf.mxu0
        %v827 = vadd.f32 0.0, %v826
        %828 = vmatmul.bf16.gmra.mxu0 %v399
        %v829 = vpop.f32.mrf.mxu0
        %v830 = vadd.f32 0.0, %v829
        %v831 = vpop.f32.mrf.mxu0
        %v832 = vadd.f32 0.0, %v831
        %833 = vmatmul.bf16.gmra.mxu0 %v402
        %v834 = vpop.f32.mrf.mxu0
        %v835 = vadd.f32 0.0, %v834
        %v836 = vpop.f32.mrf.mxu0
        %v837 = vadd.f32 0.0, %v836
        %838 = vmatmul.bf16.gmra.mxu0 %v405
        %v839 = vpop.f32.mrf.mxu0
        %v840 = vadd.f32 0.0, %v839
        %v841 = vpop.f32.mrf.mxu0
        %v842 = vadd.f32 0.0, %v841
        %843 = vmatmul.bf16.gmra.mxu0 %v408
        %v844 = vpop.f32.mrf.mxu0
        %v845 = vadd.f32 0.0, %v844
        %v846 = vpop.f32.mrf.mxu0
        %v847 = vadd.f32 0.0, %v846
        %848 = vmatmul.bf16.gmra.mxu0 %v411
        %v849 = vpop.f32.mrf.mxu0
        %v850 = vadd.f32 0.0, %v849
        %v851 = vpop.f32.mrf.mxu0
        %v852 = vadd.f32 0.0, %v851
        %853 = vdwg.mxu0
        %854 = vmatpush.bf16.msra.mxu0 0
        %855 = vmatpush.bf16.msra.mxu0 0
        %856 = vmatpush.bf16.msra.mxu0 0
        %857 = vmatpush.bf16.msra.mxu0 0
        %858 = vmatpush.bf16.msra.mxu0 0
        %859 = vmatpush.bf16.msra.mxu0 0
        %860 = vmatpush.bf16.msra.mxu0 %v361
        %861 = vmatpush.bf16.msra.mxu0 %v349
        %862 = vmatmul.bf16.gmra.mxu0 %v390
        %v863 = vpop.f32.mrf.mxu0
        %v864 = vadd.f32 0.0, %v863
        %v865 = vpop.f32.mrf.mxu0
        %v866 = vadd.f32 0.0, %v865
        %867 = vmatmul.bf16.gmra.mxu0 %v393
        %v868 = vpop.f32.mrf.mxu0
        %v869 = vadd.f32 0.0, %v868
        %v870 = vpop.f32.mrf.mxu0
        %v871 = vadd.f32 0.0, %v870
        %872 = vmatmul.bf16.gmra.mxu0 %v396
        %v873 = vpop.f32.mrf.mxu0
        %v874 = vadd.f32 0.0, %v873
        %v875 = vpop.f32.mrf.mxu0
        %v876 = vadd.f32 0.0, %v875
        %877 = vmatmul.bf16.gmra.mxu0 %v399
        %v878 = vpop.f32.mrf.mxu0
        %v879 = vadd.f32 0.0, %v878
        %v880 = vpop.f32.mrf.mxu0
        %v881 = vadd.f32 0.0, %v880
        %882 = vmatmul.bf16.gmra.mxu0 %v402
        %v883 = vpop.f32.mrf.mxu0
        %v884 = vadd.f32 0.0, %v883
        %v885 = vpop.f32.mrf.mxu0
        %v886 = vadd.f32 0.0, %v885
        %887 = vmatmul.bf16.gmra.mxu0 %v405
        %v888 = vpop.f32.mrf.mxu0
        %v889 = vadd.f32 0.0, %v888
        %v890 = vpop.f32.mrf.mxu0
        %v891 = vadd.f32 0.0, %v890
        %892 = vmatmul.bf16.gmra.mxu0 %v408
        %v893 = vpop.f32.mrf.mxu0
        %v894 = vadd.f32 0.0, %v893
        %v895 = vpop.f32.mrf.mxu0
        %v896 = vadd.f32 0.0, %v895
        %897 = vmatmul.bf16.gmra.mxu0 %v411
        %v898 = vpop.f32.mrf.mxu0
        %v899 = vadd.f32 0.0, %v898
        %v900 = vpop.f32.mrf.mxu0
        %v901 = vadd.f32 0.0, %v900
        %902 = vdwg.mxu0
        %903 = vmatpush.bf16.msra.mxu0 0
        %904 = vmatpush.bf16.msra.mxu0 0
        %905 = vmatpush.bf16.msra.mxu0 0
        %906 = vmatpush.bf16.msra.mxu0 0
        %907 = vmatpush.bf16.msra.mxu0 0
        %908 = vmatpush.bf16.msra.mxu0 0
        %909 = vmatpush.bf16.msra.mxu0 %v362
        %910 = vmatpush.bf16.msra.mxu0 %v350
        %911 = vmatmul.bf16.gmra.mxu0 %v390
        %v912 = vpop.f32.mrf.mxu0
        %v913 = vadd.f32 0.0, %v912
        %v914 = vpop.f32.mrf.mxu0
        %v915 = vadd.f32 0.0, %v914
        %916 = vmatmul.bf16.gmra.mxu0 %v393
        %v917 = vpop.f32.mrf.mxu0
        %v918 = vadd.f32 0.0, %v917
        %v919 = vpop.f32.mrf.mxu0
        %v920 = vadd.f32 0.0, %v919
        %921 = vmatmul.bf16.gmra.mxu0 %v396
        %v922 = vpop.f32.mrf.mxu0
        %v923 = vadd.f32 0.0, %v922
        %v924 = vpop.f32.mrf.mxu0
        %v925 = vadd.f32 0.0, %v924
        %926 = vmatmul.bf16.gmra.mxu0 %v399
        %v927 = vpop.f32.mrf.mxu0
        %v928 = vadd.f32 0.0, %v927
        %v929 = vpop.f32.mrf.mxu0
        %v930 = vadd.f32 0.0, %v929
        %931 = vmatmul.bf16.gmra.mxu0 %v402
        %v932 = vpop.f32.mrf.mxu0
        %v933 = vadd.f32 0.0, %v932
        %v934 = vpop.f32.mrf.mxu0
        %v935 = vadd.f32 0.0, %v934
        %936 = vmatmul.bf16.gmra.mxu0 %v405
        %v937 = vpop.f32.mrf.mxu0
        %v938 = vadd.f32 0.0, %v937
        %v939 = vpop.f32.mrf.mxu0
        %v940 = vadd.f32 0.0, %v939
        %941 = vmatmul.bf16.gmra.mxu0 %v408
        %v942 = vpop.f32.mrf.mxu0
        %v943 = vadd.f32 0.0, %v942
        %v944 = vpop.f32.mrf.mxu0
        %v945 = vadd.f32 0.0, %v944
        %946 = vmatmul.bf16.gmra.mxu0 %v411
        %v947 = vpop.f32.mrf.mxu0
        %v948 = vadd.f32 0.0, %v947
        %v949 = vpop.f32.mrf.mxu0
        %v950 = vadd.f32 0.0, %v949
        %951 = vdwg.mxu0
        %952 = vmatpush.bf16.msra.mxu0 0
        %953 = vmatpush.bf16.msra.mxu0 0
        %954 = vmatpush.bf16.msra.mxu0 0
        %955 = vmatpush.bf16.msra.mxu0 0
        %956 = vmatpush.bf16.msra.mxu0 0
        %957 = vmatpush.bf16.msra.mxu0 0
        %958 = vmatpush.bf16.msra.mxu0 %v363
        %959 = vmatpush.bf16.msra.mxu0 %v351
        %960 = vmatmul.bf16.gmra.mxu0 %v390
        %v961 = vpop.f32.mrf.mxu0
        %v962 = vadd.f32 0.0, %v961
        %v963 = vpop.f32.mrf.mxu0
        %v964 = vadd.f32 0.0, %v963
        %965 = vmatmul.bf16.gmra.mxu0 %v393
        %v966 = vpop.f32.mrf.mxu0
        %v967 = vadd.f32 0.0, %v966
        %v968 = vpop.f32.mrf.mxu0
        %v969 = vadd.f32 0.0, %v968
        %970 = vmatmul.bf16.gmra.mxu0 %v396
        %v971 = vpop.f32.mrf.mxu0
        %v972 = vadd.f32 0.0, %v971
        %v973 = vpop.f32.mrf.mxu0
        %v974 = vadd.f32 0.0, %v973
        %975 = vmatmul.bf16.gmra.mxu0 %v399
        %v976 = vpop.f32.mrf.mxu0
        %v977 = vadd.f32 0.0, %v976
        %v978 = vpop.f32.mrf.mxu0
        %v979 = vadd.f32 0.0, %v978
        %980 = vmatmul.bf16.gmra.mxu0 %v402
        %v981 = vpop.f32.mrf.mxu0
        %v982 = vadd.f32 0.0, %v981
        %v983 = vpop.f32.mrf.mxu0
        %v984 = vadd.f32 0.0, %v983
        %985 = vmatmul.bf16.gmra.mxu0 %v405
        %v986 = vpop.f32.mrf.mxu0
        %v987 = vadd.f32 0.0, %v986
        %v988 = vpop.f32.mrf.mxu0
        %v989 = vadd.f32 0.0, %v988
        %990 = vmatmul.bf16.gmra.mxu0 %v408
        %v991 = vpop.f32.mrf.mxu0
        %v992 = vadd.f32 0.0, %v991
        %v993 = vpop.f32.mrf.mxu0
        %v994 = vadd.f32 0.0, %v993
        %995 = vmatmul.bf16.gmra.mxu0 %v411
        %v996 = vpop.f32.mrf.mxu0
        %v997 = vadd.f32 0.0, %v996
        %v998 = vpop.f32.mrf.mxu0
        %v999 = vadd.f32 0.0, %v998
        %1000 = vdwg.mxu0
        %vm1017 = vcmask 1046528
        %v1018 = vrot.slane %v472, 1
        %v1019 = vrot.slane %v474, 1
        %v1020 = vsel %vm1017, %v1018, %v1019
        %v1021 = vrot.slane %v477, 1
        %v1022 = vrot.slane %v479, 1
        %v1023 = vsel %vm1017, %v1021, %v1022
        %v1024 = vrot.slane %v482, 1
        %v1025 = vrot.slane %v484, 1
        %v1026 = vsel %vm1017, %v1024, %v1025
        %v1027 = vrot.slane %v487, 1
        %v1028 = vrot.slane %v489, 1
        %v1029 = vsel %vm1017, %v1027, %v1028
        %v1030 = vrot.slane %v492, 1
        %v1031 = vrot.slane %v494, 1
        %v1032 = vsel %vm1017, %v1030, %v1031
        %v1033 = vrot.slane %v497, 1
        %v1034 = vrot.slane %v499, 1
        %v1035 = vsel %vm1017, %v1033, %v1034
        %v1036 = vrot.slane %v502, 1
        %v1037 = vrot.slane %v504, 1
        %v1038 = vsel %vm1017, %v1036, %v1037
        %v1039 = vrot.slane %v507, 1
        %v1040 = vrot.slane %v509, 1
        %v1041 = vsel %vm1017, %v1039, %v1040
        %v1058 = vadd.f32 %v423, %v1020
        %v1059 = vadd.f32 %v425, %v1019
        %v1060 = vadd.f32 %v428, %v1023
        %v1061 = vadd.f32 %v430, %v1022
        %v1062 = vadd.f32 %v433, %v1026
        %v1063 = vadd.f32 %v435, %v1025
        %v1064 = vadd.f32 %v438, %v1029
        %v1065 = vadd.f32 %v440, %v1028
        %v1066 = vadd.f32 %v443, %v1032
        %v1067 = vadd.f32 %v445, %v1031
        %v1068 = vadd.f32 %v448, %v1035
        %v1069 = vadd.f32 %v450, %v1034
        %v1070 = vadd.f32 %v453, %v1038
        %v1071 = vadd.f32 %v455, %v1037
        %v1072 = vadd.f32 %v458, %v1041
        %v1073 = vadd.f32 %v460, %v1040
        %vm1090 = vcmask 1045504
        %v1091 = vrot.slane %v521, 2
        %v1092 = vrot.slane %v523, 2
        %v1093 = vsel %vm1090, %v1091, %v1092
        %v1094 = vrot.slane %v526, 2
        %v1095 = vrot.slane %v528, 2
        %v1096 = vsel %vm1090, %v1094, %v1095
        %v1097 = vrot.slane %v531, 2
        %v1098 = vrot.slane %v533, 2
        %v1099 = vsel %vm1090, %v1097, %v1098
        %v1100 = vrot.slane %v536, 2
        %v1101 = vrot.slane %v538, 2
        %v1102 = vsel %vm1090, %v1100, %v1101
        %v1103 = vrot.slane %v541, 2
        %v1104 = vrot.slane %v543, 2
        %v1105 = vsel %vm1090, %v1103, %v1104
        %v1106 = vrot.slane %v546, 2
        %v1107 = vrot.slane %v548, 2
        %v1108 = vsel %vm1090, %v1106, %v1107
        %v1109 = vrot.slane %v551, 2
        %v1110 = vrot.slane %v553, 2
        %v1111 = vsel %vm1090, %v1109, %v1110
        %v1112 = vrot.slane %v556, 2
        %v1113 = vrot.slane %v558, 2
        %v1114 = vsel %vm1090, %v1112, %v1113
        %v1131 = vadd.f32 %v1058, %v1093
        %v1132 = vadd.f32 %v1059, %v1092
        %v1133 = vadd.f32 %v1060, %v1096
        %v1134 = vadd.f32 %v1061, %v1095
        %v1135 = vadd.f32 %v1062, %v1099
        %v1136 = vadd.f32 %v1063, %v1098
        %v1137 = vadd.f32 %v1064, %v1102
        %v1138 = vadd.f32 %v1065, %v1101
        %v1139 = vadd.f32 %v1066, %v1105
        %v1140 = vadd.f32 %v1067, %v1104
        %v1141 = vadd.f32 %v1068, %v1108
        %v1142 = vadd.f32 %v1069, %v1107
        %v1143 = vadd.f32 %v1070, %v1111
        %v1144 = vadd.f32 %v1071, %v1110
        %v1145 = vadd.f32 %v1072, %v1114
        %v1146 = vadd.f32 %v1073, %v1113
        %v1147 = vsel %vm1090, %v1132, -inf
        %v1148 = vmax.f32 %v1131, %v1147
        %v1149 = vrot.slane %v1148, 4
        %v1150 = vmax.f32 %v1148, %v1149
        %v1151 = vrot.slane %v1150, 2
        %v1152 = vmax.f32 %v1150, %v1151
        %v1153 = vrot.slane %v1152, 1
        %v1154 = vmax.f32 %v1152, %v1153
        %v1155 = vsel %vm1090, %v1134, -inf
        %v1156 = vmax.f32 %v1133, %v1155
        %v1157 = vrot.slane %v1156, 4
        %v1158 = vmax.f32 %v1156, %v1157
        %v1159 = vrot.slane %v1158, 2
        %v1160 = vmax.f32 %v1158, %v1159
        %v1161 = vrot.slane %v1160, 1
        %v1162 = vmax.f32 %v1160, %v1161
        %v1163 = vsel %vm1090, %v1136, -inf
        %v1164 = vmax.f32 %v1135, %v1163
        %v1165 = vrot.slane %v1164, 4
        %v1166 = vmax.f32 %v1164, %v1165
        %v1167 = vrot.slane %v1166, 2
        %v1168 = vmax.f32 %v1166, %v1167
        %v1169 = vrot.slane %v1168, 1
        %v1170 = vmax.f32 %v1168, %v1169
        %v1171 = vsel %vm1090, %v1138, -inf
        %v1172 = vmax.f32 %v1137, %v1171
        %v1173 = vrot.slane %v1172, 4
        %v1174 = vmax.f32 %v1172, %v1173
        %v1175 = vrot.slane %v1174, 2
        %v1176 = vmax.f32 %v1174, %v1175
        %v1177 = vrot.slane %v1176, 1
        %v1178 = vmax.f32 %v1176, %v1177
        %v1179 = vsel %vm1090, %v1140, -inf
        %v1180 = vmax.f32 %v1139, %v1179
        %v1181 = vrot.slane %v1180, 4
        %v1182 = vmax.f32 %v1180, %v1181
        %v1183 = vrot.slane %v1182, 2
        %v1184 = vmax.f32 %v1182, %v1183
        %v1185 = vrot.slane %v1184, 1
        %v1186 = vmax.f32 %v1184, %v1185
        %v1187 = vsel %vm1090, %v1142, -inf
        %v1188 = vmax.f32 %v1141, %v1187
        %v1189 = vrot.slane %v1188, 4
        %v1190 = vmax.f32 %v1188, %v1189
        %v1191 = vrot.slane %v1190, 2
        %v1192 = vmax.f32 %v1190, %v1191
        %v1193 = vrot.slane %v1192, 1
        %v1194 = vmax.f32 %v1192, %v1193
        %v1195 = vsel %vm1090, %v1144, -inf
        %v1196 = vmax.f32 %v1143, %v1195
        %v1197 = vrot.slane %v1196, 4
        %v1198 = vmax.f32 %v1196, %v1197
        %v1199 = vrot.slane %v1198, 2
        %v1200 = vmax.f32 %v1198, %v1199
        %v1201 = vrot.slane %v1200, 1
        %v1202 = vmax.f32 %v1200, %v1201
        %v1203 = vsel %vm1090, %v1146, -inf
        %v1204 = vmax.f32 %v1145, %v1203
        %v1205 = vrot.slane %v1204, 4
        %v1206 = vmax.f32 %v1204, %v1205
        %v1207 = vrot.slane %v1206, 2
        %v1208 = vmax.f32 %v1206, %v1207
        %v1209 = vrot.slane %v1208, 1
        %v1210 = vmax.f32 %v1208, %v1209
        %v1211 = vld [vmem:[%s2] sm:$0x1]
        %v1212 = vperm.slane %v1211, 0
        %v1213 = vadd.f32 %v1154, %v1212
        %v1214 = vadd.f32 %v1162, %v1212
        %v1215 = vadd.f32 %v1170, %v1212
        %v1216 = vadd.f32 %v1178, %v1212
        %v1217 = vadd.f32 %v1186, %v1212
        %v1218 = vadd.f32 %v1194, %v1212
        %v1219 = vadd.f32 %v1202, %v1212
        %v1220 = vadd.f32 %v1210, %v1212
        %v1221 = vmax.f32 %v1213, 0.0
        %v1222 = vmax.f32 %v1214, 0.0
        %v1223 = vmax.f32 %v1215, 0.0
        %v1224 = vmax.f32 %v1216, 0.0
        %v1225 = vmax.f32 %v1217, 0.0
        %v1226 = vmax.f32 %v1218, 0.0
        %v1227 = vmax.f32 %v1219, 0.0
        %v1228 = vmax.f32 %v1220, 0.0
        %v1229 = vld [vmem:[%s2 + $0x3] sm:$0x1]
        %v1246 = vrot.slane %v619, 1
        %v1247 = vrot.slane %v621, 1
        %v1248 = vsel %vm1017, %v1246, %v1247
        %v1249 = vrot.slane %v624, 1
        %v1250 = vrot.slane %v626, 1
        %v1251 = vsel %vm1017, %v1249, %v1250
        %v1252 = vrot.slane %v629, 1
        %v1253 = vrot.slane %v631, 1
        %v1254 = vsel %vm1017, %v1252, %v1253
        %v1255 = vrot.slane %v634, 1
        %v1256 = vrot.slane %v636, 1
        %v1257 = vsel %vm1017, %v1255, %v1256
        %v1258 = vrot.slane %v639, 1
        %v1259 = vrot.slane %v641, 1
        %v1260 = vsel %vm1017, %v1258, %v1259
        %v1261 = vrot.slane %v644, 1
        %v1262 = vrot.slane %v646, 1
        %v1263 = vsel %vm1017, %v1261, %v1262
        %v1264 = vrot.slane %v649, 1
        %v1265 = vrot.slane %v651, 1
        %v1266 = vsel %vm1017, %v1264, %v1265
        %v1267 = vrot.slane %v654, 1
        %v1268 = vrot.slane %v656, 1
        %v1269 = vsel %vm1017, %v1267, %v1268
        %v1286 = vadd.f32 %v570, %v1248
        %v1287 = vadd.f32 %v572, %v1247
        %v1288 = vadd.f32 %v575, %v1251
        %v1289 = vadd.f32 %v577, %v1250
        %v1290 = vadd.f32 %v580, %v1254
        %v1291 = vadd.f32 %v582, %v1253
        %v1292 = vadd.f32 %v585, %v1257
        %v1293 = vadd.f32 %v587, %v1256
        %v1294 = vadd.f32 %v590, %v1260
        %v1295 = vadd.f32 %v592, %v1259
        %v1296 = vadd.f32 %v595, %v1263
        %v1297 = vadd.f32 %v597, %v1262
        %v1298 = vadd.f32 %v600, %v1266
        %v1299 = vadd.f32 %v602, %v1265
        %v1300 = vadd.f32 %v605, %v1269
        %v1301 = vadd.f32 %v607, %v1268
        %v1318 = vrot.slane %v668, 2
        %v1319 = vrot.slane %v670, 2
        %v1320 = vsel %vm1090, %v1318, %v1319
        %v1321 = vrot.slane %v673, 2
        %v1322 = vrot.slane %v675, 2
        %v1323 = vsel %vm1090, %v1321, %v1322
        %v1324 = vrot.slane %v678, 2
        %v1325 = vrot.slane %v680, 2
        %v1326 = vsel %vm1090, %v1324, %v1325
        %v1327 = vrot.slane %v683, 2
        %v1328 = vrot.slane %v685, 2
        %v1329 = vsel %vm1090, %v1327, %v1328
        %v1330 = vrot.slane %v688, 2
        %v1331 = vrot.slane %v690, 2
        %v1332 = vsel %vm1090, %v1330, %v1331
        %v1333 = vrot.slane %v693, 2
        %v1334 = vrot.slane %v695, 2
        %v1335 = vsel %vm1090, %v1333, %v1334
        %v1336 = vrot.slane %v698, 2
        %v1337 = vrot.slane %v700, 2
        %v1338 = vsel %vm1090, %v1336, %v1337
        %v1339 = vrot.slane %v703, 2
        %v1340 = vrot.slane %v705, 2
        %v1341 = vsel %vm1090, %v1339, %v1340
        %v1358 = vadd.f32 %v1286, %v1320
        %v1359 = vadd.f32 %v1287, %v1319
        %v1360 = vadd.f32 %v1288, %v1323
        %v1361 = vadd.f32 %v1289, %v1322
        %v1362 = vadd.f32 %v1290, %v1326
        %v1363 = vadd.f32 %v1291, %v1325
        %v1364 = vadd.f32 %v1292, %v1329
        %v1365 = vadd.f32 %v1293, %v1328
        %v1366 = vadd.f32 %v1294, %v1332
        %v1367 = vadd.f32 %v1295, %v1331
        %v1368 = vadd.f32 %v1296, %v1335
        %v1369 = vadd.f32 %v1297, %v1334
        %v1370 = vadd.f32 %v1298, %v1338
        %v1371 = vadd.f32 %v1299, %v1337
        %v1372 = vadd.f32 %v1300, %v1341
        %v1373 = vadd.f32 %v1301, %v1340
        %vm1390 = vcmask 1044480
        %v1391 = vrot.slane %v717, 3
        %v1392 = vrot.slane %v719, 3
        %v1393 = vsel %vm1390, %v1391, %v1392
        %v1394 = vrot.slane %v722, 3
        %v1395 = vrot.slane %v724, 3
        %v1396 = vsel %vm1390, %v1394, %v1395
        %v1397 = vrot.slane %v727, 3
        %v1398 = vrot.slane %v729, 3
        %v1399 = vsel %vm1390, %v1397, %v1398
        %v1400 = vrot.slane %v732, 3
        %v1401 = vrot.slane %v734, 3
        %v1402 = vsel %vm1390, %v1400, %v1401
        %v1403 = vrot.slane %v737, 3
        %v1404 = vrot.slane %v739, 3
        %v1405 = vsel %vm1390, %v1403, %v1404
        %v1406 = vrot.slane %v742, 3
        %v1407 = vrot.slane %v744, 3
        %v1408 = vsel %vm1390, %v1406, %v1407
        %v1409 = vrot.slane %v747, 3
        %v1410 = vrot.slane %v749, 3
        %v1411 = vsel %vm1390, %v1409, %v1410
        %v1412 = vrot.slane %v752, 3
        %v1413 = vrot.slane %v754, 3
        %v1414 = vsel %vm1390, %v1412, %v1413
        %v1431 = vadd.f32 %v1358, %v1393
        %v1432 = vadd.f32 %v1359, %v1392
        %v1433 = vadd.f32 %v1360, %v1396
        %v1434 = vadd.f32 %v1361, %v1395
        %v1435 = vadd.f32 %v1362, %v1399
        %v1436 = vadd.f32 %v1363, %v1398
        %v1437 = vadd.f32 %v1364, %v1402
        %v1438 = vadd.f32 %v1365, %v1401
        %v1439 = vadd.f32 %v1366, %v1405
        %v1440 = vadd.f32 %v1367, %v1404
        %v1441 = vadd.f32 %v1368, %v1408
        %v1442 = vadd.f32 %v1369, %v1407
        %v1443 = vadd.f32 %v1370, %v1411
        %v1444 = vadd.f32 %v1371, %v1410
        %v1445 = vadd.f32 %v1372, %v1414
        %v1446 = vadd.f32 %v1373, %v1413
        %v1447 = vsel %vm1390, %v1432, -inf
        %v1448 = vmax.f32 %v1431, %v1447
        %v1449 = vrot.slane %v1448, 4
        %v1450 = vmax.f32 %v1448, %v1449
        %v1451 = vrot.slane %v1450, 2
        %v1452 = vmax.f32 %v1450, %v1451
        %v1453 = vrot.slane %v1452, 1
        %v1454 = vmax.f32 %v1452, %v1453
        %v1455 = vsel %vm1390, %v1434, -inf
        %v1456 = vmax.f32 %v1433, %v1455
        %v1457 = vrot.slane %v1456, 4
        %v1458 = vmax.f32 %v1456, %v1457
        %v1459 = vrot.slane %v1458, 2
        %v1460 = vmax.f32 %v1458, %v1459
        %v1461 = vrot.slane %v1460, 1
        %v1462 = vmax.f32 %v1460, %v1461
        %v1463 = vsel %vm1390, %v1436, -inf
        %v1464 = vmax.f32 %v1435, %v1463
        %v1465 = vrot.slane %v1464, 4
        %v1466 = vmax.f32 %v1464, %v1465
        %v1467 = vrot.slane %v1466, 2
        %v1468 = vmax.f32 %v1466, %v1467
        %v1469 = vrot.slane %v1468, 1
        %v1470 = vmax.f32 %v1468, %v1469
        %v1471 = vsel %vm1390, %v1438, -inf
        %v1472 = vmax.f32 %v1437, %v1471
        %v1473 = vrot.slane %v1472, 4
        %v1474 = vmax.f32 %v1472, %v1473
        %v1475 = vrot.slane %v1474, 2
        %v1476 = vmax.f32 %v1474, %v1475
        %v1477 = vrot.slane %v1476, 1
        %v1478 = vmax.f32 %v1476, %v1477
        %v1479 = vsel %vm1390, %v1440, -inf
        %v1480 = vmax.f32 %v1439, %v1479
        %v1481 = vrot.slane %v1480, 4
        %v1482 = vmax.f32 %v1480, %v1481
        %v1483 = vrot.slane %v1482, 2
        %v1484 = vmax.f32 %v1482, %v1483
        %v1485 = vrot.slane %v1484, 1
        %v1486 = vmax.f32 %v1484, %v1485
        %v1487 = vsel %vm1390, %v1442, -inf
        %v1488 = vmax.f32 %v1441, %v1487
        %v1489 = vrot.slane %v1488, 4
        %v1490 = vmax.f32 %v1488, %v1489
        %v1491 = vrot.slane %v1490, 2
        %v1492 = vmax.f32 %v1490, %v1491
        %v1493 = vrot.slane %v1492, 1
        %v1494 = vmax.f32 %v1492, %v1493
        %v1495 = vsel %vm1390, %v1444, -inf
        %v1496 = vmax.f32 %v1443, %v1495
        %v1497 = vrot.slane %v1496, 4
        %v1498 = vmax.f32 %v1496, %v1497
        %v1499 = vrot.slane %v1498, 2
        %v1500 = vmax.f32 %v1498, %v1499
        %v1501 = vrot.slane %v1500, 1
        %v1502 = vmax.f32 %v1500, %v1501
        %v1503 = vsel %vm1390, %v1446, -inf
        %v1504 = vmax.f32 %v1445, %v1503
        %v1505 = vrot.slane %v1504, 4
        %v1506 = vmax.f32 %v1504, %v1505
        %v1507 = vrot.slane %v1506, 2
        %v1508 = vmax.f32 %v1506, %v1507
        %v1509 = vrot.slane %v1508, 1
        %v1510 = vmax.f32 %v1508, %v1509
        %v1511 = vld [vmem:[%s2 + $0x1] sm:$0x1]
        %v1512 = vperm.slane %v1511, 0
        %v1513 = vadd.f32 %v1454, %v1512
        %v1514 = vadd.f32 %v1462, %v1512
        %v1515 = vadd.f32 %v1470, %v1512
        %v1516 = vadd.f32 %v1478, %v1512
        %v1517 = vadd.f32 %v1486, %v1512
        %v1518 = vadd.f32 %v1494, %v1512
        %v1519 = vadd.f32 %v1502, %v1512
        %v1520 = vadd.f32 %v1510, %v1512
        %v1521 = vmax.f32 %v1513, 0.0
        %v1522 = vmax.f32 %v1514, 0.0
        %v1523 = vmax.f32 %v1515, 0.0
        %v1524 = vmax.f32 %v1516, 0.0
        %v1525 = vmax.f32 %v1517, 0.0
        %v1526 = vmax.f32 %v1518, 0.0
        %v1527 = vmax.f32 %v1519, 0.0
        %v1528 = vmax.f32 %v1520, 0.0
        %v1529 = vld [vmem:[%s2 + $0x4] sm:$0x1]
        %v1538 = vrot.slane %v1522, 7
        %vm1539 = vcmask 1041409
        %v1540 = vsel %vm1539, %v1538, %v1521
        %v1541 = vrot.slane %v1523, 6
        %vm1542 = vcmask 1042434
        %v1543 = vsel %vm1542, %v1541, %v1540
        %v1544 = vrot.slane %v1524, 5
        %vm1545 = vcmask 1043459
        %v1546 = vsel %vm1545, %v1544, %v1543
        %v1547 = vrot.slane %v1525, 4
        %vm1548 = vcmask 1044484
        %v1549 = vsel %vm1548, %v1547, %v1546
        %v1550 = vrot.slane %v1526, 3
        %vm1551 = vcmask 1045509
        %v1552 = vsel %vm1551, %v1550, %v1549
        %v1553 = vrot.slane %v1527, 2
        %vm1554 = vcmask 1046534
        %v1555 = vsel %vm1554, %v1553, %v1552
        %v1556 = vrot.slane %v1528, 1
        %vm1557 = vcmask 1047559
        %v1558 = vsel %vm1557, %v1556, %v1555
        %1560 = vmatpush.xpose.msra.mxu0 0.0
        %1561 = vmatpush.xpose.msra.mxu0 0.0
        %1562 = vmatpush.xpose.msra.mxu0 0.0
        %1563 = vmatpush.xpose.msra.mxu0 0.0
        %1564 = vmatpush.xpose.msra.mxu0 0.0
        %1565 = vmatpush.xpose.msra.mxu0 0.0
        %1566 = vmatpush.xpose.msra.mxu0 0.0
        %1567 = vmatpush.xpose.msra.mxu0 0.0
        %1568 = vmatpush.xpose.msra.mxu0 0.0
        %1569 = vmatpush.xpose.msra.mxu0 0.0
        %1570 = vmatpush.xpose.msra.mxu0 0.0
        %1571 = vmatpush.xpose.msra.mxu0 0.0
        %1572 = vmatpush.xpose.msra.mxu0 0.0
        %1573 = vmatpush.xpose.msra.mxu0 0.0
        %1574 = vmatpush.xpose.msra.mxu0 0.0
        %1575 = vmatpush.xpose.msra.mxu0 %v1558
        %1576 = vmatmul.f32.gmra.mxu0 %v1529
        %v1577 = vpop.f32.mrf.mxu0
        %v1578 = vadd.f32 0.0, %v1577
        %1579 = vdwg.mxu0
        %v1588 = vrot.slane %v1222, 7
        %v1589 = vsel %vm1539, %v1588, %v1221
        %v1590 = vrot.slane %v1223, 6
        %v1591 = vsel %vm1542, %v1590, %v1589
        %v1592 = vrot.slane %v1224, 5
        %v1593 = vsel %vm1545, %v1592, %v1591
        %v1594 = vrot.slane %v1225, 4
        %v1595 = vsel %vm1548, %v1594, %v1593
        %v1596 = vrot.slane %v1226, 3
        %v1597 = vsel %vm1551, %v1596, %v1595
        %v1598 = vrot.slane %v1227, 2
        %v1599 = vsel %vm1554, %v1598, %v1597
        %v1600 = vrot.slane %v1228, 1
        %v1601 = vsel %vm1557, %v1600, %v1599
        %1603 = vmatpush.xpose.msra.mxu0 0.0
        %1604 = vmatpush.xpose.msra.mxu0 0.0
        %1605 = vmatpush.xpose.msra.mxu0 0.0
        %1606 = vmatpush.xpose.msra.mxu0 0.0
        %1607 = vmatpush.xpose.msra.mxu0 0.0
        %1608 = vmatpush.xpose.msra.mxu0 0.0
        %1609 = vmatpush.xpose.msra.mxu0 0.0
        %1610 = vmatpush.xpose.msra.mxu0 0.0
        %1611 = vmatpush.xpose.msra.mxu0 0.0
        %1612 = vmatpush.xpose.msra.mxu0 0.0
        %1613 = vmatpush.xpose.msra.mxu0 0.0
        %1614 = vmatpush.xpose.msra.mxu0 0.0
        %1615 = vmatpush.xpose.msra.mxu0 0.0
        %1616 = vmatpush.xpose.msra.mxu0 0.0
        %1617 = vmatpush.xpose.msra.mxu0 0.0
        %1618 = vmatpush.xpose.msra.mxu0 %v1601
        %1619 = vmatmul.f32.gmra.mxu0 %v1229
        %v1620 = vpop.f32.mrf.mxu0
        %v1621 = vadd.f32 %v1578, %v1620
        %1622 = vdwg.mxu0
        %v1639 = vrot.slane %v815, 1
        %v1640 = vrot.slane %v817, 1
        %v1641 = vsel %vm1017, %v1639, %v1640
        %v1642 = vrot.slane %v820, 1
        %v1643 = vrot.slane %v822, 1
        %v1644 = vsel %vm1017, %v1642, %v1643
        %v1645 = vrot.slane %v825, 1
        %v1646 = vrot.slane %v827, 1
        %v1647 = vsel %vm1017, %v1645, %v1646
        %v1648 = vrot.slane %v830, 1
        %v1649 = vrot.slane %v832, 1
        %v1650 = vsel %vm1017, %v1648, %v1649
        %v1651 = vrot.slane %v835, 1
        %v1652 = vrot.slane %v837, 1
        %v1653 = vsel %vm1017, %v1651, %v1652
        %v1654 = vrot.slane %v840, 1
        %v1655 = vrot.slane %v842, 1
        %v1656 = vsel %vm1017, %v1654, %v1655
        %v1657 = vrot.slane %v845, 1
        %v1658 = vrot.slane %v847, 1
        %v1659 = vsel %vm1017, %v1657, %v1658
        %v1660 = vrot.slane %v850, 1
        %v1661 = vrot.slane %v852, 1
        %v1662 = vsel %vm1017, %v1660, %v1661
        %v1679 = vadd.f32 %v766, %v1641
        %v1680 = vadd.f32 %v768, %v1640
        %v1681 = vadd.f32 %v771, %v1644
        %v1682 = vadd.f32 %v773, %v1643
        %v1683 = vadd.f32 %v776, %v1647
        %v1684 = vadd.f32 %v778, %v1646
        %v1685 = vadd.f32 %v781, %v1650
        %v1686 = vadd.f32 %v783, %v1649
        %v1687 = vadd.f32 %v786, %v1653
        %v1688 = vadd.f32 %v788, %v1652
        %v1689 = vadd.f32 %v791, %v1656
        %v1690 = vadd.f32 %v793, %v1655
        %v1691 = vadd.f32 %v796, %v1659
        %v1692 = vadd.f32 %v798, %v1658
        %v1693 = vadd.f32 %v801, %v1662
        %v1694 = vadd.f32 %v803, %v1661
        %v1711 = vrot.slane %v864, 2
        %v1712 = vrot.slane %v866, 2
        %v1713 = vsel %vm1090, %v1711, %v1712
        %v1714 = vrot.slane %v869, 2
        %v1715 = vrot.slane %v871, 2
        %v1716 = vsel %vm1090, %v1714, %v1715
        %v1717 = vrot.slane %v874, 2
        %v1718 = vrot.slane %v876, 2
        %v1719 = vsel %vm1090, %v1717, %v1718
        %v1720 = vrot.slane %v879, 2
        %v1721 = vrot.slane %v881, 2
        %v1722 = vsel %vm1090, %v1720, %v1721
        %v1723 = vrot.slane %v884, 2
        %v1724 = vrot.slane %v886, 2
        %v1725 = vsel %vm1090, %v1723, %v1724
        %v1726 = vrot.slane %v889, 2
        %v1727 = vrot.slane %v891, 2
        %v1728 = vsel %vm1090, %v1726, %v1727
        %v1729 = vrot.slane %v894, 2
        %v1730 = vrot.slane %v896, 2
        %v1731 = vsel %vm1090, %v1729, %v1730
        %v1732 = vrot.slane %v899, 2
        %v1733 = vrot.slane %v901, 2
        %v1734 = vsel %vm1090, %v1732, %v1733
        %v1751 = vadd.f32 %v1679, %v1713
        %v1752 = vadd.f32 %v1680, %v1712
        %v1753 = vadd.f32 %v1681, %v1716
        %v1754 = vadd.f32 %v1682, %v1715
        %v1755 = vadd.f32 %v1683, %v1719
        %v1756 = vadd.f32 %v1684, %v1718
        %v1757 = vadd.f32 %v1685, %v1722
        %v1758 = vadd.f32 %v1686, %v1721
        %v1759 = vadd.f32 %v1687, %v1725
        %v1760 = vadd.f32 %v1688, %v1724
        %v1761 = vadd.f32 %v1689, %v1728
        %v1762 = vadd.f32 %v1690, %v1727
        %v1763 = vadd.f32 %v1691, %v1731
        %v1764 = vadd.f32 %v1692, %v1730
        %v1765 = vadd.f32 %v1693, %v1734
        %v1766 = vadd.f32 %v1694, %v1733
        %v1783 = vrot.slane %v913, 3
        %v1784 = vrot.slane %v915, 3
        %v1785 = vsel %vm1390, %v1783, %v1784
        %v1786 = vrot.slane %v918, 3
        %v1787 = vrot.slane %v920, 3
        %v1788 = vsel %vm1390, %v1786, %v1787
        %v1789 = vrot.slane %v923, 3
        %v1790 = vrot.slane %v925, 3
        %v1791 = vsel %vm1390, %v1789, %v1790
        %v1792 = vrot.slane %v928, 3
        %v1793 = vrot.slane %v930, 3
        %v1794 = vsel %vm1390, %v1792, %v1793
        %v1795 = vrot.slane %v933, 3
        %v1796 = vrot.slane %v935, 3
        %v1797 = vsel %vm1390, %v1795, %v1796
        %v1798 = vrot.slane %v938, 3
        %v1799 = vrot.slane %v940, 3
        %v1800 = vsel %vm1390, %v1798, %v1799
        %v1801 = vrot.slane %v943, 3
        %v1802 = vrot.slane %v945, 3
        %v1803 = vsel %vm1390, %v1801, %v1802
        %v1804 = vrot.slane %v948, 3
        %v1805 = vrot.slane %v950, 3
        %v1806 = vsel %vm1390, %v1804, %v1805
        %v1823 = vadd.f32 %v1751, %v1785
        %v1824 = vadd.f32 %v1752, %v1784
        %v1825 = vadd.f32 %v1753, %v1788
        %v1826 = vadd.f32 %v1754, %v1787
        %v1827 = vadd.f32 %v1755, %v1791
        %v1828 = vadd.f32 %v1756, %v1790
        %v1829 = vadd.f32 %v1757, %v1794
        %v1830 = vadd.f32 %v1758, %v1793
        %v1831 = vadd.f32 %v1759, %v1797
        %v1832 = vadd.f32 %v1760, %v1796
        %v1833 = vadd.f32 %v1761, %v1800
        %v1834 = vadd.f32 %v1762, %v1799
        %v1835 = vadd.f32 %v1763, %v1803
        %v1836 = vadd.f32 %v1764, %v1802
        %v1837 = vadd.f32 %v1765, %v1806
        %v1838 = vadd.f32 %v1766, %v1805
        %vm1855 = vcmask 1043456
        %v1856 = vrot.slane %v962, 4
        %v1857 = vrot.slane %v964, 4
        %v1858 = vsel %vm1855, %v1856, %v1857
        %v1859 = vrot.slane %v967, 4
        %v1860 = vrot.slane %v969, 4
        %v1861 = vsel %vm1855, %v1859, %v1860
        %v1862 = vrot.slane %v972, 4
        %v1863 = vrot.slane %v974, 4
        %v1864 = vsel %vm1855, %v1862, %v1863
        %v1865 = vrot.slane %v977, 4
        %v1866 = vrot.slane %v979, 4
        %v1867 = vsel %vm1855, %v1865, %v1866
        %v1868 = vrot.slane %v982, 4
        %v1869 = vrot.slane %v984, 4
        %v1870 = vsel %vm1855, %v1868, %v1869
        %v1871 = vrot.slane %v987, 4
        %v1872 = vrot.slane %v989, 4
        %v1873 = vsel %vm1855, %v1871, %v1872
        %v1874 = vrot.slane %v992, 4
        %v1875 = vrot.slane %v994, 4
        %v1876 = vsel %vm1855, %v1874, %v1875
        %v1877 = vrot.slane %v997, 4
        %v1878 = vrot.slane %v999, 4
        %v1879 = vsel %vm1855, %v1877, %v1878
        %v1896 = vadd.f32 %v1823, %v1858
        %v1897 = vadd.f32 %v1824, %v1857
        %v1898 = vadd.f32 %v1825, %v1861
        %v1899 = vadd.f32 %v1826, %v1860
        %v1900 = vadd.f32 %v1827, %v1864
        %v1901 = vadd.f32 %v1828, %v1863
        %v1902 = vadd.f32 %v1829, %v1867
        %v1903 = vadd.f32 %v1830, %v1866
        %v1904 = vadd.f32 %v1831, %v1870
        %v1905 = vadd.f32 %v1832, %v1869
        %v1906 = vadd.f32 %v1833, %v1873
        %v1907 = vadd.f32 %v1834, %v1872
        %v1908 = vadd.f32 %v1835, %v1876
        %v1909 = vadd.f32 %v1836, %v1875
        %v1910 = vadd.f32 %v1837, %v1879
        %v1911 = vadd.f32 %v1838, %v1878
        %v1912 = vsel %vm1855, %v1897, -inf
        %v1913 = vmax.f32 %v1896, %v1912
        %v1914 = vrot.slane %v1913, 4
        %v1915 = vmax.f32 %v1913, %v1914
        %v1916 = vrot.slane %v1915, 2
        %v1917 = vmax.f32 %v1915, %v1916
        %v1918 = vrot.slane %v1917, 1
        %v1919 = vmax.f32 %v1917, %v1918
        %v1920 = vsel %vm1855, %v1899, -inf
        %v1921 = vmax.f32 %v1898, %v1920
        %v1922 = vrot.slane %v1921, 4
        %v1923 = vmax.f32 %v1921, %v1922
        %v1924 = vrot.slane %v1923, 2
        %v1925 = vmax.f32 %v1923, %v1924
        %v1926 = vrot.slane %v1925, 1
        %v1927 = vmax.f32 %v1925, %v1926
        %v1928 = vsel %vm1855, %v1901, -inf
        %v1929 = vmax.f32 %v1900, %v1928
        %v1930 = vrot.slane %v1929, 4
        %v1931 = vmax.f32 %v1929, %v1930
        %v1932 = vrot.slane %v1931, 2
        %v1933 = vmax.f32 %v1931, %v1932
        %v1934 = vrot.slane %v1933, 1
        %v1935 = vmax.f32 %v1933, %v1934
        %v1936 = vsel %vm1855, %v1903, -inf
        %v1937 = vmax.f32 %v1902, %v1936
        %v1938 = vrot.slane %v1937, 4
        %v1939 = vmax.f32 %v1937, %v1938
        %v1940 = vrot.slane %v1939, 2
        %v1941 = vmax.f32 %v1939, %v1940
        %v1942 = vrot.slane %v1941, 1
        %v1943 = vmax.f32 %v1941, %v1942
        %v1944 = vsel %vm1855, %v1905, -inf
        %v1945 = vmax.f32 %v1904, %v1944
        %v1946 = vrot.slane %v1945, 4
        %v1947 = vmax.f32 %v1945, %v1946
        %v1948 = vrot.slane %v1947, 2
        %v1949 = vmax.f32 %v1947, %v1948
        %v1950 = vrot.slane %v1949, 1
        %v1951 = vmax.f32 %v1949, %v1950
        %v1952 = vsel %vm1855, %v1907, -inf
        %v1953 = vmax.f32 %v1906, %v1952
        %v1954 = vrot.slane %v1953, 4
        %v1955 = vmax.f32 %v1953, %v1954
        %v1956 = vrot.slane %v1955, 2
        %v1957 = vmax.f32 %v1955, %v1956
        %v1958 = vrot.slane %v1957, 1
        %v1959 = vmax.f32 %v1957, %v1958
        %v1960 = vsel %vm1855, %v1909, -inf
        %v1961 = vmax.f32 %v1908, %v1960
        %v1962 = vrot.slane %v1961, 4
        %v1963 = vmax.f32 %v1961, %v1962
        %v1964 = vrot.slane %v1963, 2
        %v1965 = vmax.f32 %v1963, %v1964
        %v1966 = vrot.slane %v1965, 1
        %v1967 = vmax.f32 %v1965, %v1966
        %v1968 = vsel %vm1855, %v1911, -inf
        %v1969 = vmax.f32 %v1910, %v1968
        %v1970 = vrot.slane %v1969, 4
        %v1971 = vmax.f32 %v1969, %v1970
        %v1972 = vrot.slane %v1971, 2
        %v1973 = vmax.f32 %v1971, %v1972
        %v1974 = vrot.slane %v1973, 1
        %v1975 = vmax.f32 %v1973, %v1974
        %v1976 = vld [vmem:[%s2 + $0x2] sm:$0x1]
        %v1977 = vperm.slane %v1976, 0
        %v1978 = vadd.f32 %v1919, %v1977
        %v1979 = vadd.f32 %v1927, %v1977
        %v1980 = vadd.f32 %v1935, %v1977
        %v1981 = vadd.f32 %v1943, %v1977
        %v1982 = vadd.f32 %v1951, %v1977
        %v1983 = vadd.f32 %v1959, %v1977
        %v1984 = vadd.f32 %v1967, %v1977
        %v1985 = vadd.f32 %v1975, %v1977
        %v1986 = vmax.f32 %v1978, 0.0
        %v1987 = vmax.f32 %v1979, 0.0
        %v1988 = vmax.f32 %v1980, 0.0
        %v1989 = vmax.f32 %v1981, 0.0
        %v1990 = vmax.f32 %v1982, 0.0
        %v1991 = vmax.f32 %v1983, 0.0
        %v1992 = vmax.f32 %v1984, 0.0
        %v1993 = vmax.f32 %v1985, 0.0
        %v1994 = vld [vmem:[%s2 + $0x5] sm:$0x1]
        %v2003 = vrot.slane %v1987, 7
        %v2004 = vsel %vm1539, %v2003, %v1986
        %v2005 = vrot.slane %v1988, 6
        %v2006 = vsel %vm1542, %v2005, %v2004
        %v2007 = vrot.slane %v1989, 5
        %v2008 = vsel %vm1545, %v2007, %v2006
        %v2009 = vrot.slane %v1990, 4
        %v2010 = vsel %vm1548, %v2009, %v2008
        %v2011 = vrot.slane %v1991, 3
        %v2012 = vsel %vm1551, %v2011, %v2010
        %v2013 = vrot.slane %v1992, 2
        %v2014 = vsel %vm1554, %v2013, %v2012
        %v2015 = vrot.slane %v1993, 1
        %v2016 = vsel %vm1557, %v2015, %v2014
        %2018 = vmatpush.xpose.msra.mxu0 0.0
        %2019 = vmatpush.xpose.msra.mxu0 0.0
        %2020 = vmatpush.xpose.msra.mxu0 0.0
        %2021 = vmatpush.xpose.msra.mxu0 0.0
        %2022 = vmatpush.xpose.msra.mxu0 0.0
        %2023 = vmatpush.xpose.msra.mxu0 0.0
        %2024 = vmatpush.xpose.msra.mxu0 0.0
        %2025 = vmatpush.xpose.msra.mxu0 0.0
        %2026 = vmatpush.xpose.msra.mxu0 0.0
        %2027 = vmatpush.xpose.msra.mxu0 0.0
        %2028 = vmatpush.xpose.msra.mxu0 0.0
        %2029 = vmatpush.xpose.msra.mxu0 0.0
        %2030 = vmatpush.xpose.msra.mxu0 0.0
        %2031 = vmatpush.xpose.msra.mxu0 0.0
        %2032 = vmatpush.xpose.msra.mxu0 0.0
        %2033 = vmatpush.xpose.msra.mxu0 %v2016
        %2034 = vmatmul.f32.gmra.mxu0 %v1994
        %v2035 = vpop.f32.mrf.mxu0
        %v2036 = vadd.f32 0.0, %v2035
        %2037 = vdwg.mxu0
        %v2038 = vadd.f32 %v1621, %v2036
        %v2039 = vld [vmem:[%s2 + $0x6] sm:$0x1]
        %2041 = vset.pattern.permute.xlu0 0
        %2042 = vperm.xlu0 %2041, %v2039
        %v2043 = vpop.permute.xlu0 %2042
        %v2045 = vadd.f32 %v2038, %v2043
        %v2046 = vxor.u32 %v2045, 2147483648
        %v2047 = vmul.f32 %v2046, 1.442695
        %v2048 = vpow.pop %v2047
        %v2049 = vadd.f32 %v2048, 1.0
        %v2050 = vrcp.pop %v2049
        %v2051 = vmul.f32 %v2049, %v2050
        %v2052 = vsub.f32 1.0, %v2051
        %v2053 = vmul.f32 %v2050, %v2052
        %v2054 = vadd.f32 %v2050, %v2053
        %vm2055 = vweird.f32 %v2049
        %vm2056 = vweird.f32 %v2050
        %vm2057 = vmor %vm2055, %vm2056
        %v2058 = vsel %vm2057, %v2050, %v2054
        %v2059 = vand.u32 2147483647, %v2049
        %vm2060 = vcmp.eq.f32.partialorder %v2059, 8.507059e+37
        %v2061 = vand.u32 %v2049, 2147483648
        %v2062 = vor.u32 1.1754944e-38, %v2061
        %v2063 = vsel %vm2060, %v2062, %v2058
        %v2064 = vmul.f32 1.0, %v2063
        %vm2065 = vcmask 57344
        %2066 = vst.msk [vmem:[%s180] sm:$0x1] %vm2065, %v2064
        %s2067 = sand.u32 %s94, 1
        %s2068 = scalar_lea.sflag [#allocation4], %s2067
        %s2069 = sand.u32 %s94, 1
        %s2070 = scalar_lea.vmem [#allocation5], %s2069
        // Predicated region
        $region37: #{tpu_custom_call.1} parent=31 // pred_check
          %p2071 = pneg %p104
        $region38: #{tpu_custom_call.1} parent=31 // pred_check_branch
          %2073 = sbr.rel (%p2071) target = $region40
        $region39: #{tpu_custom_call.1} parent=31 // pred_region
          %2075 = vsyncadd %s2068, 0
          %s2076 = scalar_lea.hbm %s3, %s18
          %s2078 = sshll.u32 %s2070, 4
          %s2079 = int_to_ptr.vmem [resolvable:$true] %s2078
          %s2080 = sshll.u32 %s2076, 4
          %s2081 = int_to_ptr.hbm [resolvable:$true] %s2080
          %2083 = dma.vmem_to_hbm [thread:$0]  %s2079, 16, %s2081, %s2068
        $region40: #{tpu_custom_call.1} parent=31 // pred_fallthru
          _
      $region32: #{tpu_custom_call.1} parent=5 // pred_fallthru
        _
      %p2084 = scmp.le.s32.totalorder 2, %s13
      // Predicated region
      $region41: #{tpu_custom_call.1} parent=5 // pred_check
        %p2085 = pneg %p2084
      $region42: #{tpu_custom_call.1} parent=5 // pred_check_branch
        %2087 = sbr.rel (%p2085) target = $region44
      $region43: #{tpu_custom_call.1} parent=5 // pred_region
        %s2088 = ssub.s32 %s13, 2
        // Predicated region
        $region45: #{tpu_custom_call.1} parent=43 // pred_check
          %p2089 = pneg %p110
        $region46: #{tpu_custom_call.1} parent=43 // pred_check_branch
          %2091 = sbr.rel (%p2089) target = $region48
        $region47: #{tpu_custom_call.1} parent=43 // pred_region
          %s2092 = sand.u32 %s95, 1
          %s2093 = scalar_lea.sflag [#allocation4], %s2092
          %s2094 = sand.u32 %s95, 1
          %s2095 = scalar_lea.vmem [#allocation5], %s2094
          %2097 = dma.done %s2093, 16
        $region48: #{tpu_custom_call.1} parent=43 // pred_fallthru
          _
      $region44: #{tpu_custom_call.1} parent=5 // pred_fallthru
        _
    $region6: #{tpu_custom_call.1} parent=1 // loop_footer
      %s17 = sadd.s32 1, %s13
    $region7: #{tpu_custom_call.1} parent=1 // loop_footer_branch
      %12 = sbr.rel target = $region3
    $region8: #{tpu_custom_call.1} parent=1 // loop_exit
      _
    %2098 = vsyncpa [#allocation3], 1
    %s2099 = scalar_lea.sflag [#allocation3], 1
    %2100 = vsyncpa %s2099, 1
    %2101 = vsyncpa [#allocation4], 1
    %s2102 = scalar_lea.sflag [#allocation4], 1
    %2103 = vsyncpa %s2102, 1

</llo_original>
